<compile_context>
chip_gen: v5e
topology: v5e:2x2
jax: 0.10.0
libtpu: 0.0.40
codegen_flags: <defaults>
</compile_context>

<pallas_src>
import jax
import jax.numpy as jnp
from jax.experimental import pallas as pl
from jax.experimental.pallas import tpu as pltpu

C1 = 64     # conv1 output channels (fixed by the module)
C2 = 128    # conv2 output channels (fixed by the module)
PAD = 8     # sublane-aligned offset of real data inside the padded staging buffers


def _convlstm_attn_kernel(x_ref,                            # (Bblk, T, Cin)
                          w1_ref, b1_ref,                   # (3, Cin, 64), (1, 64)
                          w2c_ref, b2_ref,                  # (192, 128), (1, 128)   taps fused along K
                          wfc_ref, bfc_ref,                 # (128, H), (1, H)
                          wih_ref, bl_ref,                  # (H, 4H), (1, 4H)       gate-concat input proj
                          whha_ref,                         # (H, 5H) = [Whh_cat | Wa]
                          ba_ref,                           # (1, H)
                          wo_ref, bo_ref,                   # (H, O), (1, O)
                          out_ref,                          # (Bblk, O)
                          attn_ref,                         # (T4, Bblk, H)  time-major
                          xb, s1f, pb, s2f, xproj):         # VMEM scratch
    f32 = jnp.float32
    Bblk, T, Cin = x_ref.shape
    T2, T4 = T // 2, T // 4
    H = ba_ref.shape[1]
    H4 = 4 * H

    # ---- Conv1d(Cin -> 64, k=3, pad=1) + ReLU; batched: M = Bblk * T ----
    xv = x_ref[...]                                              # (Bblk, T, Cin)
    zrow = jnp.zeros((Bblk, 1, Cin), f32)
    xb[:, PAD - 1:PAD, :] = zrow                                 # left pad row  (x[-1] = 0)
    xb[:, PAD + T:PAD + T + 1, :] = zrow                         # right pad row (x[T]  = 0)
    xb[:, PAD:PAD + T, :] = xv                                   # aligned data store

    x_prev = xb[:, PAD - 1:PAD - 1 + T, :].reshape(Bblk * T, Cin)   # x[t-1]
    x_cur = xv.reshape(Bblk * T, Cin)                               # x[t]
    x_next = xb[:, PAD + 1:PAD + 1 + T, :].reshape(Bblk * T, Cin)   # x[t+1]
    y1 = (jnp.dot(x_prev, w1_ref[0], preferred_element_type=f32)
          + jnp.dot(x_cur, w1_ref[1], preferred_element_type=f32)
          + jnp.dot(x_next, w1_ref[2], preferred_element_type=f32)
          + b1_ref[...])
    s1f[...] = jnp.maximum(y1, 0.0)                              # (Bblk*T, 64), row = b*T + t

    # ---- MaxPool1d(2, 2): stride-2 sublane loads on the flat buffer.
    # T is even, so even/odd rows never mix batch elements. Row of p1 = b*T2 + j.
    n1 = Bblk * T2
    p1 = jnp.maximum(s1f[pl.ds(0, n1, stride=2), :],
                     s1f[pl.ds(1, n1, stride=2), :])             # (Bblk*T2, 64)
    p1r = p1.reshape(Bblk, T2, C1)

    # ---- Conv1d(64 -> 128, k=3, pad=1) + ReLU; three taps fused into one K=192 matmul ----
    zrow2 = jnp.zeros((Bblk, 1, C1), f32)
    pb[:, PAD - 1:PAD, :] = zrow2
    pb[:, PAD + T2:PAD + T2 + 1, :] = zrow2
    pb[:, PAD:PAD + T2, :] = p1r

    q = jnp.concatenate([pb[:, PAD - 1:PAD - 1 + T2, :],         # p1[j-1]
                         p1r,                                    # p1[j]
                         pb[:, PAD + 1:PAD + 1 + T2, :]],        # p1[j+1]
                        axis=-1).reshape(Bblk * T2, 3 * C1)
    y2 = jnp.dot(q, w2c_ref[...], preferred_element_type=f32) + b2_ref[...]
    s2f[...] = jnp.maximum(y2, 0.0)                              # (Bblk*T2, 128), row = b*T2 + j

    # ---- MaxPool1d(2, 2) ----
    n2 = Bblk * T4
    p2 = jnp.maximum(s2f[pl.ds(0, n2, stride=2), :],
                     s2f[pl.ds(1, n2, stride=2), :])             # (Bblk*T4, 128), row = b*T4 + t

    # ---- fc: Linear(128 -> H); hoisted LSTM input projection (all 4 gates at once) ----
    mapped = jnp.dot(p2, wfc_ref[...], preferred_element_type=f32) + bfc_ref[...]       # (Bblk*T4, H)
    xproj[...] = jnp.dot(mapped, wih_ref[...], preferred_element_type=f32) + bl_ref[...]  # (Bblk*T4, 4H)

    # ---- LSTM(H -> H), num_layers=1, batched over Bblk.
    # One (Bblk, H) @ (H, 5H) matmul per step: cols [0,4H) feed next step's gates,
    # cols [4H,5H) are this step's attention scores (h_t @ Wa).
    h = jnp.zeros((Bblk, H), f32)
    c = jnp.zeros((Bblk, H), f32)
    hproj = jnp.zeros((Bblk, H4), f32)                           # h0 @ Whh = 0
    hs, scs = [], []
    # TODO(synk): for large T4 switch this static unroll to lax.fori_loop(..., unroll=True)
    for t in range(T4):
        g = xproj[pl.ds(t, Bblk, stride=T4), :] + hproj          # rows {b*T4 + t}
        i_g = jax.nn.sigmoid(g[:, 0:H])
        f_g = jax.nn.sigmoid(g[:, H:2 * H])
        g_g = jnp.tanh(g[:, 2 * H:3 * H])
        o_g = jax.nn.sigmoid(g[:, 3 * H:4 * H])
        c = f_g * c + i_g * g_g
        h = o_g * jnp.tanh(c)
        hw = jnp.dot(h, whha_ref[...], preferred_element_type=f32)   # (Bblk, 5H)
        hproj = hw[:, 0:H4]
        hs.append(h)
        scs.append(hw[:, H4:] + ba_ref[...])                         # (Bblk, H) attn scores

    # ---- Attention: softmax over time, context = sum_t attn_t * h_t ----
    m = scs[0]
    for t in range(1, T4):
        m = jnp.maximum(m, scs[t])
    es = [jnp.exp(s - m) for s in scs]
    z = es[0]
    for t in range(1, T4):
        z = z + es[t]
    inv_z = 1.0 / z
    ctx = jnp.zeros((Bblk, H), f32)
    for t in range(T4):
        a_t = es[t] * inv_z
        attn_ref[t] = a_t                                        # time-major block store
        ctx = ctx + a_t * hs[t]

    # ---- final Linear(H -> O) ----
    out_ref[...] = jnp.dot(ctx, wo_ref[...], preferred_element_type=f32) + bo_ref[...]


def convlstm_attn_forward(x, params, block_b=None):
    """x: (B, T, Cin) float32.  Returns (out (B, O), attn_scores (B, T//4, H))."""
    B, T, Cin = x.shape
    assert T % 4 == 0, "two stride-2 max pools require T % 4 == 0"
    T2, T4 = T // 2, T // 4
    H = params["wa"].shape[0]
    O = params["wo"].shape[1]
    f32 = jnp.float32

    if block_b is None:
        block_b = B if B <= 8 else 8                    # batch block folded into matmul M
    assert B % block_b == 0, "batch must be divisible by the batch block"
    Bblk = block_b
    nblk = B // Bblk

    # One-time host-side weight repacking (constants; folds at trace/compile time).
    w2c = params["w2"].reshape(3 * C1, C2)                                # conv2 taps fused along K
    wih_c = jnp.transpose(params["wih"], (1, 0, 2)).reshape(H, 4 * H)     # (H, 4H) gate-concat
    whh_c = jnp.transpose(params["whh"], (1, 0, 2)).reshape(H, 4 * H)
    whha = jnp.concatenate([whh_c, params["wa"]], axis=1)                 # (H, 5H): [Whh | Wa]
    bl_c = params["bl"].reshape(1, 4 * H)

    weights = [params["w1"].astype(f32), params["b1"].astype(f32),
               w2c.astype(f32), params["b2"].astype(f32),
               params["wfc"].astype(f32), params["bfc"].astype(f32),
               wih_c.astype(f32), bl_c.astype(f32),
               whha.astype(f32), params["ba"].astype(f32),
               params["wo"].astype(f32), params["bo"].astype(f32)]

    def full_spec(a):
        return pl.BlockSpec(a.shape, lambda i, nd=a.ndim: (0,) * nd)

    in_specs = [pl.BlockSpec((Bblk, T, Cin), lambda i: (i, 0, 0))]
    in_specs += [full_spec(w) for w in weights]

    out_shape = (jax.ShapeDtypeStruct((B, O), f32),
                 jax.ShapeDtypeStruct((T4, B, H), f32))          # attention scores, time-major
    out_specs = (pl.BlockSpec((Bblk, O), lambda i: (i, 0)),
                 pl.BlockSpec((T4, Bblk, H), lambda i: (0, i, 0)))

    scratch_shapes = [
        pltpu.VMEM((Bblk, T + 2 * PAD, Cin), f32),    # padded conv1 input staging
        pltpu.VMEM((Bblk * T, C1), f32),              # conv1 + relu (flat, b-major)
        pltpu.VMEM((Bblk, T2 + 2 * PAD, C1), f32),    # padded conv2 input staging
        pltpu.VMEM((Bblk * T2, C2), f32),             # conv2 + relu (flat)
        pltpu.VMEM((Bblk * T4, 4 * H), f32),          # hoisted LSTM input projection
    ]

    grid_spec = pltpu.PrefetchScalarGridSpec(
        num_scalar_prefetch=0,
        grid=(nblk,),
        in_specs=in_specs,
        out_specs=out_specs,
        scratch_shapes=scratch_shapes,
    )

    out, attn_tm = pl.pallas_call(
        _convlstm_attn_kernel,
        out_shape=out_shape,
        grid_spec=grid_spec,
        compiler_params=pltpu.CompilerParams(
            dimension_semantics=("parallel",)),       # batch blocks are independent (megacore)
    )(x.astype(f32), *weights)

    return out, jnp.transpose(attn_tm, (1, 0, 2))


def init_params(key, input_size, hidden, out_size):
    """Deterministic synthetic parameters (PyTorch-style uniform fan-in init)."""
    ks = jax.random.split(key, 13)

    def u(k, shape, fan_in):
        bound = float(fan_in) ** -0.5
        return jax.random.uniform(k, shape, jnp.float32, -bound, bound)

    p = {}
    p["w1"] = u(ks[0], (3, input_size, C1), input_size * 3)   # conv1 weight (tap, in, out)
    p["b1"] = u(ks[1], (1, C1), input_size * 3)
    p["w2"] = u(ks[2], (3, C1, C2), C1 * 3)                   # conv2 weight (tap, in, out)
    p["b2"] = u(ks[3], (1, C2), C1 * 3)
    p["wfc"] = u(ks[4], (C2, hidden), C2)
    p["bfc"] = u(ks[5], (1, hidden), C2)
    p["wih"] = u(ks[6], (4, hidden, hidden), hidden)          # LSTM input weights (gate i,f,g,o)
    p["whh"] = u(ks[7], (4, hidden, hidden), hidden)          # LSTM hidden weights
    p["bl"] = u(ks[8], (4, 1, hidden), hidden)                # b_ih + b_hh combined, per gate
    p["wa"] = u(ks[9], (hidden, hidden), hidden)              # attention linear
    p["ba"] = u(ks[10], (1, hidden), hidden)
    p["wo"] = u(ks[11], (hidden, out_size), hidden)           # output linear
    p["bo"] = u(ks[12], (1, out_size), hidden)
    return p


def reference_forward(x, p):
    """Pure-JAX reference mirroring the PyTorch forward, for correctness check."""
    hp = jax.lax.Precision.HIGHEST
    mm = lambda a, b: jnp.matmul(a, b, precision=hp)

    def conv1d(xx, w, b):
        L = xx.shape[1]
        xpad = jnp.pad(xx, ((0, 0), (1, 1), (0, 0)))
        return mm(xpad[:, 0:L], w[0]) + mm(xpad[:, 1:L + 1], w[1]) + mm(xpad[:, 2:L + 2], w[2]) + b

    def pool(xx):
        Bq, L, C = xx.shape
        return jnp.max(xx.reshape(Bq, L // 2, 2, C), axis=2)

    B = x.shape[0]
    H = p["wa"].shape[0]
    y = pool(jnp.maximum(conv1d(x, p["w1"], p["b1"]), 0.0))
    y = pool(jnp.maximum(conv1d(y, p["w2"], p["b2"]), 0.0))
    mapped = mm(y, p["wfc"]) + p["bfc"]                       # (B, T4, H)
    T4 = mapped.shape[1]

    h = jnp.zeros((B, H), jnp.float32)
    c = jnp.zeros((B, H), jnp.float32)
    outs = []
    for t in range(T4):
        xt = mapped[:, t, :]
        gate = lambda g: mm(xt, p["wih"][g]) + mm(h, p["whh"][g]) + p["bl"][g]
        i_g = jax.nn.sigmoid(gate(0))
        f_g = jax.nn.sigmoid(gate(1))
        g_g = jnp.tanh(gate(2))
        o_g = jax.nn.sigmoid(gate(3))
        c = f_g * c + i_g * g_g
        h = o_g * jnp.tanh(c)
        outs.append(h)
    lstm_out = jnp.stack(outs, axis=1)                        # (B, T4, H)

    sc = mm(lstm_out, p["wa"]) + p["ba"]
    attn = jax.nn.softmax(sc, axis=1)                         # softmax over time (dim=1)
    context = jnp.sum(attn * lstm_out, axis=1)
    out = mm(context, p["wo"]) + p["bo"]
    return out, attn


if __name__ == "__main__":
    B, T, Cin, H, O = 2, 16, 4, 32, 8            # seq=16 -> 4 steps after the two maxpools
    key = jax.random.PRNGKey(0)
    kx, kp = jax.random.split(key)
    x = jax.random.normal(kx, (B, T, Cin), jnp.float32)
    params = init_params(kp, Cin, H, O)

    out, attn = convlstm_attn_forward(x, params)
    jax.block_until_ready((out, attn))

    ref_out, ref_attn = reference_forward(x, params)
    assert out.shape == (B, O) and attn.shape == (B, T // 4, H)
    assert jnp.allclose(out, ref_out, atol=5e-3, rtol=5e-3), "output mismatch"
    assert jnp.allclose(attn, ref_attn, atol=5e-3, rtol=5e-3), "attention mismatch"

    print("KERNEL_OK")
</pallas_src>

<mosaic_0001>
module attributes {stable_mosaic.version = 11 : i64} {
  func.func @_convlstm_attn_kernel(%arg0: i32, %arg1: memref<2x16x4xf32, #tpu.memory_space<vmem>>, %arg2: memref<3x4x64xf32, #tpu.memory_space<vmem>>, %arg3: memref<1x64xf32, #tpu.memory_space<vmem>>, %arg4: memref<192x128xf32, #tpu.memory_space<vmem>>, %arg5: memref<1x128xf32, #tpu.memory_space<vmem>>, %arg6: memref<128x32xf32, #tpu.memory_space<vmem>>, %arg7: memref<1x32xf32, #tpu.memory_space<vmem>>, %arg8: memref<32x128xf32, #tpu.memory_space<vmem>>, %arg9: memref<1x128xf32, #tpu.memory_space<vmem>>, %arg10: memref<32x160xf32, #tpu.memory_space<vmem>>, %arg11: memref<1x32xf32, #tpu.memory_space<vmem>>, %arg12: memref<32x8xf32, #tpu.memory_space<vmem>>, %arg13: memref<1x8xf32, #tpu.memory_space<vmem>>, %arg14: memref<2x8xf32, #tpu.memory_space<vmem>>, %arg15: memref<4x2x32xf32, #tpu.memory_space<vmem>>, %arg16: memref<2x32x4xf32, #tpu.memory_space<vmem>>, %arg17: memref<32x64xf32, #tpu.memory_space<vmem>>, %arg18: memref<2x24x64xf32, #tpu.memory_space<vmem>>, %arg19: memref<16x128xf32, #tpu.memory_space<vmem>>, %arg20: memref<8x128xf32, #tpu.memory_space<vmem>>) attributes {dimension_semantics = [#tpu.dimension_semantics<parallel>], iteration_bounds = array<i64: 1>, scalar_prefetch = 0 : i64, scratch_operands = 5 : i64, tpu.core_type = #tpu.core_type<tc>, window_params = [{transform_indices = @transform_0, window_bounds = array<i64: 2, 16, 4>}, {pipeline_mode = #tpu.pipeline_mode<synchronous>, transform_indices = @transform_1, window_bounds = array<i64: 3, 4, 64>}, {pipeline_mode = #tpu.pipeline_mode<synchronous>, transform_indices = @transform_2, window_bounds = array<i64: 1, 64>}, {pipeline_mode = #tpu.pipeline_mode<synchronous>, transform_indices = @transform_3, window_bounds = array<i64: 192, 128>}, {pipeline_mode = #tpu.pipeline_mode<synchronous>, transform_indices = @transform_4, window_bounds = array<i64: 1, 128>}, {pipeline_mode = #tpu.pipeline_mode<synchronous>, transform_indices = @transform_5, window_bounds = array<i64: 128, 32>}, {pipeline_mode = #tpu.pipeline_mode<synchronous>, transform_indices = @transform_6, window_bounds = array<i64: 1, 32>}, {pipeline_mode = #tpu.pipeline_mode<synchronous>, transform_indices = @transform_7, window_bounds = array<i64: 32, 128>}, {pipeline_mode = #tpu.pipeline_mode<synchronous>, transform_indices = @transform_8, window_bounds = array<i64: 1, 128>}, {pipeline_mode = #tpu.pipeline_mode<synchronous>, transform_indices = @transform_9, window_bounds = array<i64: 32, 160>}, {pipeline_mode = #tpu.pipeline_mode<synchronous>, transform_indices = @transform_10, window_bounds = array<i64: 1, 32>}, {pipeline_mode = #tpu.pipeline_mode<synchronous>, transform_indices = @transform_11, window_bounds = array<i64: 32, 8>}, {pipeline_mode = #tpu.pipeline_mode<synchronous>, transform_indices = @transform_12, window_bounds = array<i64: 1, 8>}, {transform_indices = @transform_13, window_bounds = array<i64: 2, 8>}, {transform_indices = @transform_14, window_bounds = array<i64: 4, 2, 32>}]} {
    %c0 = arith.constant 0 : index
    %c0_0 = arith.constant 0 : index
    %c0_1 = arith.constant 0 : index
    %0 = vector.load %arg1[%c0, %c0_0, %c0_1] : memref<2x16x4xf32, #tpu.memory_space<vmem>>, vector<2x16x4xf32>
    %cst = arith.constant 0.000000e+00 : f32
    %1 = vector.broadcast %cst : f32 to vector<2x1x4xf32>
    %c0_2 = arith.constant 0 : index
    %c7 = arith.constant 7 : index
    %c0_3 = arith.constant 0 : index
    %2 = vector.load %arg16[%c0_2, %c7, %c0_3] : memref<2x32x4xf32, #tpu.memory_space<vmem>>, vector<2x1x4xf32>
    tpu.vector_store %arg16[%c0_2, %c7, %c0_3], %1 {strides = array<i32>} : memref<2x32x4xf32, #tpu.memory_space<vmem>>, vector<2x1x4xf32>,
    %c0_4 = arith.constant 0 : index
    %c24 = arith.constant 24 : index
    %c0_5 = arith.constant 0 : index
    %3 = vector.load %arg16[%c0_4, %c24, %c0_5] : memref<2x32x4xf32, #tpu.memory_space<vmem>>, vector<2x1x4xf32>
    tpu.vector_store %arg16[%c0_4, %c24, %c0_5], %1 {strides = array<i32>} : memref<2x32x4xf32, #tpu.memory_space<vmem>>, vector<2x1x4xf32>,
    %c0_6 = arith.constant 0 : index
    %c8 = arith.constant 8 : index
    %c0_7 = arith.constant 0 : index
    %4 = vector.load %arg16[%c0_6, %c8, %c0_7] : memref<2x32x4xf32, #tpu.memory_space<vmem>>, vector<2x16x4xf32>
    tpu.vector_store %arg16[%c0_6, %c8, %c0_7], %0 {strides = array<i32>} : memref<2x32x4xf32, #tpu.memory_space<vmem>>, vector<2x16x4xf32>,
    %c0_8 = arith.constant 0 : index
    %c7_9 = arith.constant 7 : index
    %c0_10 = arith.constant 0 : index
    %5 = vector.load %arg16[%c0_8, %c7_9, %c0_10] : memref<2x32x4xf32, #tpu.memory_space<vmem>>, vector<2x16x4xf32>
    %6 = vector.shape_cast %5 : vector<2x16x4xf32> to vector<32x4xf32>
    %7 = vector.shape_cast %0 : vector<2x16x4xf32> to vector<32x4xf32>
    %c0_11 = arith.constant 0 : index
    %c9 = arith.constant 9 : index
    %c0_12 = arith.constant 0 : index
    %8 = vector.load %arg16[%c0_11, %c9, %c0_12] : memref<2x32x4xf32, #tpu.memory_space<vmem>>, vector<2x16x4xf32>
    %9 = vector.shape_cast %8 : vector<2x16x4xf32> to vector<32x4xf32>
    %c0_13 = arith.constant 0 : index
    %c0_14 = arith.constant 0 : index
    %c0_15 = arith.constant 0 : index
    %10 = vector.load %arg2[%c0_13, %c0_14, %c0_15] : memref<3x4x64xf32, #tpu.memory_space<vmem>>, vector<1x4x64xf32>
    %11 = vector.shape_cast %10 : vector<1x4x64xf32> to vector<4x64xf32>
    %cst_16 = arith.constant dense<0.000000e+00> : vector<32x64xf32>
    %12 = tpu.matmul %6, %11, %cst_16 {dimension_numbers = #tpu.dot_dimension_numbers<[1], [0], [0], [1], [0, 0, 1, 1], [], []>} : vector<32x4xf32>, vector<4x64xf32>, vector<32x64xf32> -> vector<32x64xf32>
    %c1 = arith.constant 1 : index
    %c0_17 = arith.constant 0 : index
    %c0_18 = arith.constant 0 : index
    %13 = vector.load %arg2[%c1, %c0_17, %c0_18] : memref<3x4x64xf32, #tpu.memory_space<vmem>>, vector<1x4x64xf32>
    %14 = vector.shape_cast %13 : vector<1x4x64xf32> to vector<4x64xf32>
    %cst_19 = arith.constant dense<0.000000e+00> : vector<32x64xf32>
    %15 = tpu.matmul %7, %14, %cst_19 {dimension_numbers = #tpu.dot_dimension_numbers<[1], [0], [0], [1], [0, 0, 1, 1], [], []>} : vector<32x4xf32>, vector<4x64xf32>, vector<32x64xf32> -> vector<32x64xf32>
    %16 = arith.addf %12, %15 : vector<32x64xf32>
    %c2 = arith.constant 2 : index
    %c0_20 = arith.constant 0 : index
    %c0_21 = arith.constant 0 : index
    %17 = vector.load %arg2[%c2, %c0_20, %c0_21] : memref<3x4x64xf32, #tpu.memory_space<vmem>>, vector<1x4x64xf32>
    %18 = vector.shape_cast %17 : vector<1x4x64xf32> to vector<4x64xf32>
    %cst_22 = arith.constant dense<0.000000e+00> : vector<32x64xf32>
    %19 = tpu.matmul %9, %18, %cst_22 {dimension_numbers = #tpu.dot_dimension_numbers<[1], [0], [0], [1], [0, 0, 1, 1], [], []>} : vector<32x4xf32>, vector<4x64xf32>, vector<32x64xf32> -> vector<32x64xf32>
    %20 = arith.addf %16, %19 : vector<32x64xf32>
    %c0_23 = arith.constant 0 : index
    %c0_24 = arith.constant 0 : index
    %21 = vector.load %arg3[%c0_23, %c0_24] : memref<1x64xf32, #tpu.memory_space<vmem>>, vector<1x64xf32>
    %22 = vector.broadcast %21 : vector<1x64xf32> to vector<32x64xf32>
    %23 = arith.addf %20, %22 : vector<32x64xf32>
    %cst_25 = arith.constant 0.000000e+00 : f32
    %24 = vector.broadcast %cst_25 : f32 to vector<32x64xf32>
    %25 = arith.maximumf %23, %24 : vector<32x64xf32>
    %c0_26 = arith.constant 0 : index
    %c0_27 = arith.constant 0 : index
    %26 = vector.load %arg17[%c0_26, %c0_27] : memref<32x64xf32, #tpu.memory_space<vmem>>, vector<32x64xf32>
    tpu.vector_store %arg17[%c0_26, %c0_27], %25 {strides = array<i32>} : memref<32x64xf32, #tpu.memory_space<vmem>>, vector<32x64xf32>,
    %c0_28 = arith.constant 0 : index
    %c0_29 = arith.constant 0 : index
    %27 = tpu.strided_load %arg17[%c0_28, %c0_29] {strides = array<i32: 2, 1>} : memref<32x64xf32, #tpu.memory_space<vmem>>, vector<16x64xf32>
    %c1_30 = arith.constant 1 : index
    %c0_31 = arith.constant 0 : index
    %28 = tpu.strided_load %arg17[%c1_30, %c0_31] {strides = array<i32: 2, 1>} : memref<32x64xf32, #tpu.memory_space<vmem>>, vector<16x64xf32>
    %29 = arith.maximumf %27, %28 : vector<16x64xf32>
    %30 = vector.shape_cast %29 : vector<16x64xf32> to vector<2x8x64xf32>
    %cst_32 = arith.constant 0.000000e+00 : f32
    %31 = vector.broadcast %cst_32 : f32 to vector<2x1x64xf32>
    %c0_33 = arith.constant 0 : index
    %c7_34 = arith.constant 7 : index
    %c0_35 = arith.constant 0 : index
    %32 = vector.load %arg18[%c0_33, %c7_34, %c0_35] : memref<2x24x64xf32, #tpu.memory_space<vmem>>, vector<2x1x64xf32>
    tpu.vector_store %arg18[%c0_33, %c7_34, %c0_35], %31 {strides = array<i32>} : memref<2x24x64xf32, #tpu.memory_space<vmem>>, vector<2x1x64xf32>,
    %c0_36 = arith.constant 0 : index
    %c16 = arith.constant 16 : index
    %c0_37 = arith.constant 0 : index
    %33 = vector.load %arg18[%c0_36, %c16, %c0_37] : memref<2x24x64xf32, #tpu.memory_space<vmem>>, vector<2x1x64xf32>
    tpu.vector_store %arg18[%c0_36, %c16, %c0_37], %31 {strides = array<i32>} : memref<2x24x64xf32, #tpu.memory_space<vmem>>, vector<2x1x64xf32>,
    %c0_38 = arith.constant 0 : index
    %c8_39 = arith.constant 8 : index
    %c0_40 = arith.constant 0 : index
    %34 = vector.load %arg18[%c0_38, %c8_39, %c0_40] : memref<2x24x64xf32, #tpu.memory_space<vmem>>, vector<2x8x64xf32>
    tpu.vector_store %arg18[%c0_38, %c8_39, %c0_40], %30 {strides = array<i32>} : memref<2x24x64xf32, #tpu.memory_space<vmem>>, vector<2x8x64xf32>,
    %c0_41 = arith.constant 0 : index
    %c7_42 = arith.constant 7 : index
    %c0_43 = arith.constant 0 : index
    %35 = vector.load %arg18[%c0_41, %c7_42, %c0_43] : memref<2x24x64xf32, #tpu.memory_space<vmem>>, vector<2x8x64xf32>
    %c0_44 = arith.constant 0 : index
    %c9_45 = arith.constant 9 : index
    %c0_46 = arith.constant 0 : index
    %36 = vector.load %arg18[%c0_44, %c9_45, %c0_46] : memref<2x24x64xf32, #tpu.memory_space<vmem>>, vector<2x8x64xf32>
    %37 = tpu.concatenate %35, %30, %36 in 2 : vector<2x8x64xf32>, vector<2x8x64xf32>, vector<2x8x64xf32> -> vector<2x8x192xf32>
    %38 = vector.shape_cast %37 : vector<2x8x192xf32> to vector<16x192xf32>
    %c0_47 = arith.constant 0 : index
    %c0_48 = arith.constant 0 : index
    %39 = vector.load %arg4[%c0_47, %c0_48] : memref<192x128xf32, #tpu.memory_space<vmem>>, vector<192x128xf32>
    %cst_49 = arith.constant dense<0.000000e+00> : vector<16x128xf32>
    %40 = tpu.matmul %38, %39, %cst_49 {dimension_numbers = #tpu.dot_dimension_numbers<[1], [0], [0], [1], [0, 0, 1, 1], [], []>} : vector<16x192xf32>, vector<192x128xf32>, vector<16x128xf32> -> vector<16x128xf32>
    %c0_50 = arith.constant 0 : index
    %c0_51 = arith.constant 0 : index
    %41 = vector.load %arg5[%c0_50, %c0_51] : memref<1x128xf32, #tpu.memory_space<vmem>>, vector<1x128xf32>
    %42 = vector.broadcast %41 : vector<1x128xf32> to vector<16x128xf32>
    %43 = arith.addf %40, %42 : vector<16x128xf32>
    %cst_52 = arith.constant 0.000000e+00 : f32
    %44 = vector.broadcast %cst_52 : f32 to vector<16x128xf32>
    %45 = arith.maximumf %43, %44 : vector<16x128xf32>
    %c0_53 = arith.constant 0 : index
    %c0_54 = arith.constant 0 : index
    %46 = vector.load %arg19[%c0_53, %c0_54] : memref<16x128xf32, #tpu.memory_space<vmem>>, vector<16x128xf32>
    tpu.vector_store %arg19[%c0_53, %c0_54], %45 {strides = array<i32>} : memref<16x128xf32, #tpu.memory_space<vmem>>, vector<16x128xf32>,
    %c0_55 = arith.constant 0 : index
    %c0_56 = arith.constant 0 : index
    %47 = tpu.strided_load %arg19[%c0_55, %c0_56] {strides = array<i32: 2, 1>} : memref<16x128xf32, #tpu.memory_space<vmem>>, vector<8x128xf32>
    %c1_57 = arith.constant 1 : index
    %c0_58 = arith.constant 0 : index
    %48 = tpu.strided_load %arg19[%c1_57, %c0_58] {strides = array<i32: 2, 1>} : memref<16x128xf32, #tpu.memory_space<vmem>>, vector<8x128xf32>
    %49 = arith.maximumf %47, %48 : vector<8x128xf32>
    %c0_59 = arith.constant 0 : index
    %c0_60 = arith.constant 0 : index
    %50 = vector.load %arg6[%c0_59, %c0_60] : memref<128x32xf32, #tpu.memory_space<vmem>>, vector<128x32xf32>
    %cst_61 = arith.constant dense<0.000000e+00> : vector<8x32xf32>
    %51 = tpu.matmul %49, %50, %cst_61 {dimension_numbers = #tpu.dot_dimension_numbers<[1], [0], [0], [1], [0, 0, 1, 1], [], []>} : vector<8x128xf32>, vector<128x32xf32>, vector<8x32xf32> -> vector<8x32xf32>
    %c0_62 = arith.constant 0 : index
    %c0_63 = arith.constant 0 : index
    %52 = vector.load %arg7[%c0_62, %c0_63] : memref<1x32xf32, #tpu.memory_space<vmem>>, vector<1x32xf32>
    %53 = vector.broadcast %52 : vector<1x32xf32> to vector<8x32xf32>
    %54 = arith.addf %51, %53 : vector<8x32xf32>
    %c0_64 = arith.constant 0 : index
    %c0_65 = arith.constant 0 : index
    %55 = vector.load %arg8[%c0_64, %c0_65] : memref<32x128xf32, #tpu.memory_space<vmem>>, vector<32x128xf32>
    %cst_66 = arith.constant dense<0.000000e+00> : vector<8x128xf32>
    %56 = tpu.matmul %54, %55, %cst_66 {dimension_numbers = #tpu.dot_dimension_numbers<[1], [0], [0], [1], [0, 0, 1, 1], [], []>} : vector<8x32xf32>, vector<32x128xf32>, vector<8x128xf32> -> vector<8x128xf32>
    %c0_67 = arith.constant 0 : index
    %c0_68 = arith.constant 0 : index
    %57 = vector.load %arg9[%c0_67, %c0_68] : memref<1x128xf32, #tpu.memory_space<vmem>>, vector<1x128xf32>
    %58 = vector.broadcast %57 : vector<1x128xf32> to vector<8x128xf32>
    %59 = arith.addf %56, %58 : vector<8x128xf32>
    %c0_69 = arith.constant 0 : index
    %c0_70 = arith.constant 0 : index
    %60 = vector.load %arg20[%c0_69, %c0_70] : memref<8x128xf32, #tpu.memory_space<vmem>>, vector<8x128xf32>
    tpu.vector_store %arg20[%c0_69, %c0_70], %59 {strides = array<i32>} : memref<8x128xf32, #tpu.memory_space<vmem>>, vector<8x128xf32>,
    %cst_71 = arith.constant 0.000000e+00 : f32
    %61 = vector.broadcast %cst_71 : f32 to vector<2x32xf32>
    %cst_72 = arith.constant 0.000000e+00 : f32
    %62 = vector.broadcast %cst_72 : f32 to vector<2x128xf32>
    %c0_73 = arith.constant 0 : index
    %c0_74 = arith.constant 0 : index
    %63 = tpu.strided_load %arg20[%c0_73, %c0_74] {strides = array<i32: 4, 1>} : memref<8x128xf32, #tpu.memory_space<vmem>>, vector<2x128xf32>
    %64 = arith.addf %63, %62 : vector<2x128xf32>
    %65 = vector.extract_strided_slice %64 {offsets = [0, 0], sizes = [2, 32], strides = [1, 1]} : vector<2x128xf32> to vector<2x32xf32>
    %66 = arith.negf %65 : vector<2x32xf32>
    %67 = math.exp %66 : vector<2x32xf32>
    %cst_75 = arith.constant 1.000000e+00 : f32
    %68 = vector.broadcast %cst_75 : f32 to vector<2x32xf32>
    %69 = arith.addf %68, %67 : vector<2x32xf32>
    %70 = arith.divf %68, %69 : vector<2x32xf32>
    %71 = vector.extract_strided_slice %64 {offsets = [0, 32], sizes = [2, 32], strides = [1, 1]} : vector<2x128xf32> to vector<2x32xf32>
    %72 = arith.negf %71 : vector<2x32xf32>
    %73 = math.exp %72 : vector<2x32xf32>
    %cst_76 = arith.constant 1.000000e+00 : f32
    %74 = vector.broadcast %cst_76 : f32 to vector<2x32xf32>
    %75 = arith.addf %74, %73 : vector<2x32xf32>
    %76 = arith.divf %74, %75 : vector<2x32xf32>
    %77 = vector.extract_strided_slice %64 {offsets = [0, 64], sizes = [2, 32], strides = [1, 1]} : vector<2x128xf32> to vector<2x32xf32>
    %78 = math.tanh %77 : vector<2x32xf32>
    %79 = vector.extract_strided_slice %64 {offsets = [0, 96], sizes = [2, 32], strides = [1, 1]} : vector<2x128xf32> to vector<2x32xf32>
    %80 = arith.negf %79 : vector<2x32xf32>
    %81 = math.exp %80 : vector<2x32xf32>
    %cst_77 = arith.constant 1.000000e+00 : f32
    %82 = vector.broadcast %cst_77 : f32 to vector<2x32xf32>
    %83 = arith.addf %82, %81 : vector<2x32xf32>
    %84 = arith.divf %82, %83 : vector<2x32xf32>
    %85 = arith.mulf %76, %61 : vector<2x32xf32>
    %86 = arith.mulf %70, %78 : vector<2x32xf32>
    %87 = arith.addf %85, %86 : vector<2x32xf32>
    %88 = math.tanh %87 : vector<2x32xf32>
    %89 = arith.mulf %84, %88 : vector<2x32xf32>
    %c0_78 = arith.constant 0 : index
    %c0_79 = arith.constant 0 : index
    %90 = vector.load %arg10[%c0_78, %c0_79] : memref<32x160xf32, #tpu.memory_space<vmem>>, vector<32x160xf32>
    %cst_80 = arith.constant dense<0.000000e+00> : vector<2x160xf32>
    %91 = tpu.matmul %89, %90, %cst_80 {dimension_numbers = #tpu.dot_dimension_numbers<[1], [0], [0], [1], [0, 0, 1, 1], [], []>} : vector<2x32xf32>, vector<32x160xf32>, vector<2x160xf32> -> vector<2x160xf32>
    %92 = vector.extract_strided_slice %91 {offsets = [0, 0], sizes = [2, 128], strides = [1, 1]} : vector<2x160xf32> to vector<2x128xf32>
    %93 = vector.extract_strided_slice %91 {offsets = [0, 128], sizes = [2, 32], strides = [1, 1]} : vector<2x160xf32> to vector<2x32xf32>
    %c0_81 = arith.constant 0 : index
    %c0_82 = arith.constant 0 : index
    %94 = vector.load %arg11[%c0_81, %c0_82] : memref<1x32xf32, #tpu.memory_space<vmem>>, vector<1x32xf32>
    %95 = vector.broadcast %94 : vector<1x32xf32> to vector<2x32xf32>
    %96 = arith.addf %93, %95 : vector<2x32xf32>
    %c1_83 = arith.constant 1 : index
    %c0_84 = arith.constant 0 : index
    %97 = tpu.strided_load %arg20[%c1_83, %c0_84] {strides = array<i32: 4, 1>} : memref<8x128xf32, #tpu.memory_space<vmem>>, vector<2x128xf32>
    %98 = arith.addf %97, %92 : vector<2x128xf32>
    %99 = vector.extract_strided_slice %98 {offsets = [0, 0], sizes = [2, 32], strides = [1, 1]} : vector<2x128xf32> to vector<2x32xf32>
    %100 = arith.negf %99 : vector<2x32xf32>
    %101 = math.exp %100 : vector<2x32xf32>
    %cst_85 = arith.constant 1.000000e+00 : f32
    %102 = vector.broadcast %cst_85 : f32 to vector<2x32xf32>
    %103 = arith.addf %102, %101 : vector<2x32xf32>
    %104 = arith.divf %102, %103 : vector<2x32xf32>
    %105 = vector.extract_strided_slice %98 {offsets = [0, 32], sizes = [2, 32], strides = [1, 1]} : vector<2x128xf32> to vector<2x32xf32>
    %106 = arith.negf %105 : vector<2x32xf32>
    %107 = math.exp %106 : vector<2x32xf32>
    %cst_86 = arith.constant 1.000000e+00 : f32
    %108 = vector.broadcast %cst_86 : f32 to vector<2x32xf32>
    %109 = arith.addf %108, %107 : vector<2x32xf32>
    %110 = arith.divf %108, %109 : vector<2x32xf32>
    %111 = vector.extract_strided_slice %98 {offsets = [0, 64], sizes = [2, 32], strides = [1, 1]} : vector<2x128xf32> to vector<2x32xf32>
    %112 = math.tanh %111 : vector<2x32xf32>
    %113 = vector.extract_strided_slice %98 {offsets = [0, 96], sizes = [2, 32], strides = [1, 1]} : vector<2x128xf32> to vector<2x32xf32>
    %114 = arith.negf %113 : vector<2x32xf32>
    %115 = math.exp %114 : vector<2x32xf32>
    %cst_87 = arith.constant 1.000000e+00 : f32
    %116 = vector.broadcast %cst_87 : f32 to vector<2x32xf32>
    %117 = arith.addf %116, %115 : vector<2x32xf32>
    %118 = arith.divf %116, %117 : vector<2x32xf32>
    %119 = arith.mulf %110, %87 : vector<2x32xf32>
    %120 = arith.mulf %104, %112 : vector<2x32xf32>
    %121 = arith.addf %119, %120 : vector<2x32xf32>
    %122 = math.tanh %121 : vector<2x32xf32>
    %123 = arith.mulf %118, %122 : vector<2x32xf32>
    %c0_88 = arith.constant 0 : index
    %c0_89 = arith.constant 0 : index
    %124 = vector.load %arg10[%c0_88, %c0_89] : memref<32x160xf32, #tpu.memory_space<vmem>>, vector<32x160xf32>
    %cst_90 = arith.constant dense<0.000000e+00> : vector<2x160xf32>
    %125 = tpu.matmul %123, %124, %cst_90 {dimension_numbers = #tpu.dot_dimension_numbers<[1], [0], [0], [1], [0, 0, 1, 1], [], []>} : vector<2x32xf32>, vector<32x160xf32>, vector<2x160xf32> -> vector<2x160xf32>
    %126 = vector.extract_strided_slice %125 {offsets = [0, 0], sizes = [2, 128], strides = [1, 1]} : vector<2x160xf32> to vector<2x128xf32>
    %127 = vector.extract_strided_slice %125 {offsets = [0, 128], sizes = [2, 32], strides = [1, 1]} : vector<2x160xf32> to vector<2x32xf32>
    %c0_91 = arith.constant 0 : index
    %c0_92 = arith.constant 0 : index
    %128 = vector.load %arg11[%c0_91, %c0_92] : memref<1x32xf32, #tpu.memory_space<vmem>>, vector<1x32xf32>
    %129 = vector.broadcast %128 : vector<1x32xf32> to vector<2x32xf32>
    %130 = arith.addf %127, %129 : vector<2x32xf32>
    %c2_93 = arith.constant 2 : index
    %c0_94 = arith.constant 0 : index
    %131 = tpu.strided_load %arg20[%c2_93, %c0_94] {strides = array<i32: 4, 1>} : memref<8x128xf32, #tpu.memory_space<vmem>>, vector<2x128xf32>
    %132 = arith.addf %131, %126 : vector<2x128xf32>
    %133 = vector.extract_strided_slice %132 {offsets = [0, 0], sizes = [2, 32], strides = [1, 1]} : vector<2x128xf32> to vector<2x32xf32>
    %134 = arith.negf %133 : vector<2x32xf32>
    %135 = math.exp %134 : vector<2x32xf32>
    %cst_95 = arith.constant 1.000000e+00 : f32
    %136 = vector.broadcast %cst_95 : f32 to vector<2x32xf32>
    %137 = arith.addf %136, %135 : vector<2x32xf32>
    %138 = arith.divf %136, %137 : vector<2x32xf32>
    %139 = vector.extract_strided_slice %132 {offsets = [0, 32], sizes = [2, 32], strides = [1, 1]} : vector<2x128xf32> to vector<2x32xf32>
    %140 = arith.negf %139 : vector<2x32xf32>
    %141 = math.exp %140 : vector<2x32xf32>
    %cst_96 = arith.constant 1.000000e+00 : f32
    %142 = vector.broadcast %cst_96 : f32 to vector<2x32xf32>
    %143 = arith.addf %142, %141 : vector<2x32xf32>
    %144 = arith.divf %142, %143 : vector<2x32xf32>
    %145 = vector.extract_strided_slice %132 {offsets = [0, 64], sizes = [2, 32], strides = [1, 1]} : vector<2x128xf32> to vector<2x32xf32>
    %146 = math.tanh %145 : vector<2x32xf32>
    %147 = vector.extract_strided_slice %132 {offsets = [0, 96], sizes = [2, 32], strides = [1, 1]} : vector<2x128xf32> to vector<2x32xf32>
    %148 = arith.negf %147 : vector<2x32xf32>
    %149 = math.exp %148 : vector<2x32xf32>
    %cst_97 = arith.constant 1.000000e+00 : f32
    %150 = vector.broadcast %cst_97 : f32 to vector<2x32xf32>
    %151 = arith.addf %150, %149 : vector<2x32xf32>
    %152 = arith.divf %150, %151 : vector<2x32xf32>
    %153 = arith.mulf %144, %121 : vector<2x32xf32>
    %154 = arith.mulf %138, %146 : vector<2x32xf32>
    %155 = arith.addf %153, %154 : vector<2x32xf32>
    %156 = math.tanh %155 : vector<2x32xf32>
    %157 = arith.mulf %152, %156 : vector<2x32xf32>
    %c0_98 = arith.constant 0 : index
    %c0_99 = arith.constant 0 : index
    %158 = vector.load %arg10[%c0_98, %c0_99] : memref<32x160xf32, #tpu.memory_space<vmem>>, vector<32x160xf32>
    %cst_100 = arith.constant dense<0.000000e+00> : vector<2x160xf32>
    %159 = tpu.matmul %157, %158, %cst_100 {dimension_numbers = #tpu.dot_dimension_numbers<[1], [0], [0], [1], [0, 0, 1, 1], [], []>} : vector<2x32xf32>, vector<32x160xf32>, vector<2x160xf32> -> vector<2x160xf32>
    %160 = vector.extract_strided_slice %159 {offsets = [0, 0], sizes = [2, 128], strides = [1, 1]} : vector<2x160xf32> to vector<2x128xf32>
    %161 = vector.extract_strided_slice %159 {offsets = [0, 128], sizes = [2, 32], strides = [1, 1]} : vector<2x160xf32> to vector<2x32xf32>
    %c0_101 = arith.constant 0 : index
    %c0_102 = arith.constant 0 : index
    %162 = vector.load %arg11[%c0_101, %c0_102] : memref<1x32xf32, #tpu.memory_space<vmem>>, vector<1x32xf32>
    %163 = vector.broadcast %162 : vector<1x32xf32> to vector<2x32xf32>
    %164 = arith.addf %161, %163 : vector<2x32xf32>
    %c3 = arith.constant 3 : index
    %c0_103 = arith.constant 0 : index
    %165 = tpu.strided_load %arg20[%c3, %c0_103] {strides = array<i32: 4, 1>} : memref<8x128xf32, #tpu.memory_space<vmem>>, vector<2x128xf32>
    %166 = arith.addf %165, %160 : vector<2x128xf32>
    %167 = vector.extract_strided_slice %166 {offsets = [0, 0], sizes = [2, 32], strides = [1, 1]} : vector<2x128xf32> to vector<2x32xf32>
    %168 = arith.negf %167 : vector<2x32xf32>
    %169 = math.exp %168 : vector<2x32xf32>
    %cst_104 = arith.constant 1.000000e+00 : f32
    %170 = vector.broadcast %cst_104 : f32 to vector<2x32xf32>
    %171 = arith.addf %170, %169 : vector<2x32xf32>
    %172 = arith.divf %170, %171 : vector<2x32xf32>
    %173 = vector.extract_strided_slice %166 {offsets = [0, 32], sizes = [2, 32], strides = [1, 1]} : vector<2x128xf32> to vector<2x32xf32>
    %174 = arith.negf %173 : vector<2x32xf32>
    %175 = math.exp %174 : vector<2x32xf32>
    %cst_105 = arith.constant 1.000000e+00 : f32
    %176 = vector.broadcast %cst_105 : f32 to vector<2x32xf32>
    %177 = arith.addf %176, %175 : vector<2x32xf32>
    %178 = arith.divf %176, %177 : vector<2x32xf32>
    %179 = vector.extract_strided_slice %166 {offsets = [0, 64], sizes = [2, 32], strides = [1, 1]} : vector<2x128xf32> to vector<2x32xf32>
    %180 = math.tanh %179 : vector<2x32xf32>
    %181 = vector.extract_strided_slice %166 {offsets = [0, 96], sizes = [2, 32], strides = [1, 1]} : vector<2x128xf32> to vector<2x32xf32>
    %182 = arith.negf %181 : vector<2x32xf32>
    %183 = math.exp %182 : vector<2x32xf32>
    %cst_106 = arith.constant 1.000000e+00 : f32
    %184 = vector.broadcast %cst_106 : f32 to vector<2x32xf32>
    %185 = arith.addf %184, %183 : vector<2x32xf32>
    %186 = arith.divf %184, %185 : vector<2x32xf32>
    %187 = arith.mulf %178, %155 : vector<2x32xf32>
    %188 = arith.mulf %172, %180 : vector<2x32xf32>
    %189 = arith.addf %187, %188 : vector<2x32xf32>
    %190 = math.tanh %189 : vector<2x32xf32>
    %191 = arith.mulf %186, %190 : vector<2x32xf32>
    %c0_107 = arith.constant 0 : index
    %c0_108 = arith.constant 0 : index
    %192 = vector.load %arg10[%c0_107, %c0_108] : memref<32x160xf32, #tpu.memory_space<vmem>>, vector<32x160xf32>
    %cst_109 = arith.constant dense<0.000000e+00> : vector<2x160xf32>
    %193 = tpu.matmul %191, %192, %cst_109 {dimension_numbers = #tpu.dot_dimension_numbers<[1], [0], [0], [1], [0, 0, 1, 1], [], []>} : vector<2x32xf32>, vector<32x160xf32>, vector<2x160xf32> -> vector<2x160xf32>
    %194 = vector.extract_strided_slice %193 {offsets = [0, 128], sizes = [2, 32], strides = [1, 1]} : vector<2x160xf32> to vector<2x32xf32>
    %c0_110 = arith.constant 0 : index
    %c0_111 = arith.constant 0 : index
    %195 = vector.load %arg11[%c0_110, %c0_111] : memref<1x32xf32, #tpu.memory_space<vmem>>, vector<1x32xf32>
    %196 = vector.broadcast %195 : vector<1x32xf32> to vector<2x32xf32>
    %197 = arith.addf %194, %196 : vector<2x32xf32>
    %198 = arith.maximumf %96, %130 : vector<2x32xf32>
    %199 = arith.maximumf %198, %164 : vector<2x32xf32>
    %200 = arith.maximumf %199, %197 : vector<2x32xf32>
    %201 = arith.subf %96, %200 : vector<2x32xf32>
    %202 = math.exp %201 : vector<2x32xf32>
    %203 = arith.subf %130, %200 : vector<2x32xf32>
    %204 = math.exp %203 : vector<2x32xf32>
    %205 = arith.subf %164, %200 : vector<2x32xf32>
    %206 = math.exp %205 : vector<2x32xf32>
    %207 = arith.subf %197, %200 : vector<2x32xf32>
    %208 = math.exp %207 : vector<2x32xf32>
    %209 = arith.addf %202, %204 : vector<2x32xf32>
    %210 = arith.addf %209, %206 : vector<2x32xf32>
    %211 = arith.addf %210, %208 : vector<2x32xf32>
    %cst_112 = arith.constant 1.000000e+00 : f32
    %212 = vector.broadcast %cst_112 : f32 to vector<2x32xf32>
    %213 = arith.divf %212, %211 : vector<2x32xf32>
    %cst_113 = arith.constant 0.000000e+00 : f32
    %214 = vector.broadcast %cst_113 : f32 to vector<2x32xf32>
    %215 = arith.mulf %202, %213 : vector<2x32xf32>
    %c0_114 = arith.constant 0 : index
    %c0_115 = arith.constant 0 : index
    %c0_116 = arith.constant 0 : index
    %216 = vector.load %arg15[%c0_114, %c0_115, %c0_116] : memref<4x2x32xf32, #tpu.memory_space<vmem>>, vector<1x2x32xf32>
    %217 = vector.shape_cast %216 : vector<1x2x32xf32> to vector<2x32xf32>
    %218 = vector.shape_cast %215 : vector<2x32xf32> to vector<1x2x32xf32>
    tpu.vector_store %arg15[%c0_114, %c0_115, %c0_116], %218 {strides = array<i32>} : memref<4x2x32xf32, #tpu.memory_space<vmem>>, vector<1x2x32xf32>,
    %219 = arith.mulf %215, %89 : vector<2x32xf32>
    %220 = arith.addf %214, %219 : vector<2x32xf32>
    %221 = arith.mulf %204, %213 : vector<2x32xf32>
    %c1_117 = arith.constant 1 : index
    %c0_118 = arith.constant 0 : index
    %c0_119 = arith.constant 0 : index
    %222 = vector.load %arg15[%c1_117, %c0_118, %c0_119] : memref<4x2x32xf32, #tpu.memory_space<vmem>>, vector<1x2x32xf32>
    %223 = vector.shape_cast %222 : vector<1x2x32xf32> to vector<2x32xf32>
    %224 = vector.shape_cast %221 : vector<2x32xf32> to vector<1x2x32xf32>
    tpu.vector_store %arg15[%c1_117, %c0_118, %c0_119], %224 {strides = array<i32>} : memref<4x2x32xf32, #tpu.memory_space<vmem>>, vector<1x2x32xf32>,
    %225 = arith.mulf %221, %123 : vector<2x32xf32>
    %226 = arith.addf %220, %225 : vector<2x32xf32>
    %227 = arith.mulf %206, %213 : vector<2x32xf32>
    %c2_120 = arith.constant 2 : index
    %c0_121 = arith.constant 0 : index
    %c0_122 = arith.constant 0 : index
    %228 = vector.load %arg15[%c2_120, %c0_121, %c0_122] : memref<4x2x32xf32, #tpu.memory_space<vmem>>, vector<1x2x32xf32>
    %229 = vector.shape_cast %228 : vector<1x2x32xf32> to vector<2x32xf32>
    %230 = vector.shape_cast %227 : vector<2x32xf32> to vector<1x2x32xf32>
    tpu.vector_store %arg15[%c2_120, %c0_121, %c0_122], %230 {strides = array<i32>} : memref<4x2x32xf32, #tpu.memory_space<vmem>>, vector<1x2x32xf32>,
    %231 = arith.mulf %227, %157 : vector<2x32xf32>
    %232 = arith.addf %226, %231 : vector<2x32xf32>
    %233 = arith.mulf %208, %213 : vector<2x32xf32>
    %c3_123 = arith.constant 3 : index
    %c0_124 = arith.constant 0 : index
    %c0_125 = arith.constant 0 : index
    %234 = vector.load %arg15[%c3_123, %c0_124, %c0_125] : memref<4x2x32xf32, #tpu.memory_space<vmem>>, vector<1x2x32xf32>
    %235 = vector.shape_cast %234 : vector<1x2x32xf32> to vector<2x32xf32>
    %236 = vector.shape_cast %233 : vector<2x32xf32> to vector<1x2x32xf32>
    tpu.vector_store %arg15[%c3_123, %c0_124, %c0_125], %236 {strides = array<i32>} : memref<4x2x32xf32, #tpu.memory_space<vmem>>, vector<1x2x32xf32>,
    %237 = arith.mulf %233, %191 : vector<2x32xf32>
    %238 = arith.addf %232, %237 : vector<2x32xf32>
    %c0_126 = arith.constant 0 : index
    %c0_127 = arith.constant 0 : index
    %239 = vector.load %arg12[%c0_126, %c0_127] : memref<32x8xf32, #tpu.memory_space<vmem>>, vector<32x8xf32>
    %cst_128 = arith.constant dense<0.000000e+00> : vector<2x8xf32>
    %240 = tpu.matmul %238, %239, %cst_128 {dimension_numbers = #tpu.dot_dimension_numbers<[1], [0], [0], [1], [0, 0, 1, 1], [], []>} : vector<2x32xf32>, vector<32x8xf32>, vector<2x8xf32> -> vector<2x8xf32>
    %c0_129 = arith.constant 0 : index
    %c0_130 = arith.constant 0 : index
    %241 = vector.load %arg13[%c0_129, %c0_130] : memref<1x8xf32, #tpu.memory_space<vmem>>, vector<1x8xf32>
    %242 = vector.broadcast %241 : vector<1x8xf32> to vector<2x8xf32>
    %243 = arith.addf %240, %242 : vector<2x8xf32>
    %c0_131 = arith.constant 0 : index
    %c0_132 = arith.constant 0 : index
    %244 = vector.load %arg14[%c0_131, %c0_132] : memref<2x8xf32, #tpu.memory_space<vmem>>, vector<2x8xf32>
    tpu.vector_store %arg14[%c0_131, %c0_132], %243 {strides = array<i32>} : memref<2x8xf32, #tpu.memory_space<vmem>>, vector<2x8xf32>,
    return
  }
  func.func @transform_0(%arg0: i32) -> (i32, i32, i32) {
    %c0_i32 = arith.constant 0 : i32
    %c0_i32_0 = arith.constant 0 : i32
    %c0_i32_1 = arith.constant 0 : i32
    return %arg0, %c0_i32, %c0_i32_0 : i32, i32, i32
  }
  func.func @transform_1(%arg0: i32) -> (i32, i32, i32) {
    %c0_i32 = arith.constant 0 : i32
    %c0_i32_0 = arith.constant 0 : i32
    %c0_i32_1 = arith.constant 0 : i32
    %c0_i32_2 = arith.constant 0 : i32
    return %c0_i32, %c0_i32_0, %c0_i32_1 : i32, i32, i32
  }
  func.func @transform_2(%arg0: i32) -> (i32, i32) {
    %c0_i32 = arith.constant 0 : i32
    %c0_i32_0 = arith.constant 0 : i32
    %c0_i32_1 = arith.constant 0 : i32
    return %c0_i32, %c0_i32_0 : i32, i32
  }
  func.func @transform_3(%arg0: i32) -> (i32, i32) {
    %c0_i32 = arith.constant 0 : i32
    %c0_i32_0 = arith.constant 0 : i32
    %c0_i32_1 = arith.constant 0 : i32
    return %c0_i32, %c0_i32_0 : i32, i32
  }
  func.func @transform_4(%arg0: i32) -> (i32, i32) {
    %c0_i32 = arith.constant 0 : i32
    %c0_i32_0 = arith.constant 0 : i32
    %c0_i32_1 = arith.constant 0 : i32
    return %c0_i32, %c0_i32_0 : i32, i32
  }
  func.func @transform_5(%arg0: i32) -> (i32, i32) {
    %c0_i32 = arith.constant 0 : i32
    %c0_i32_0 = arith.constant 0 : i32
    %c0_i32_1 = arith.constant 0 : i32
    return %c0_i32, %c0_i32_0 : i32, i32
  }
  func.func @transform_6(%arg0: i32) -> (i32, i32) {
    %c0_i32 = arith.constant 0 : i32
    %c0_i32_0 = arith.constant 0 : i32
    %c0_i32_1 = arith.constant 0 : i32
    return %c0_i32, %c0_i32_0 : i32, i32
  }
  func.func @transform_7(%arg0: i32) -> (i32, i32) {
    %c0_i32 = arith.constant 0 : i32
    %c0_i32_0 = arith.constant 0 : i32
    %c0_i32_1 = arith.constant 0 : i32
    return %c0_i32, %c0_i32_0 : i32, i32
  }
  func.func @transform_8(%arg0: i32) -> (i32, i32) {
    %c0_i32 = arith.constant 0 : i32
    %c0_i32_0 = arith.constant 0 : i32
    %c0_i32_1 = arith.constant 0 : i32
    return %c0_i32, %c0_i32_0 : i32, i32
  }
  func.func @transform_9(%arg0: i32) -> (i32, i32) {
    %c0_i32 = arith.constant 0 : i32
    %c0_i32_0 = arith.constant 0 : i32
    %c0_i32_1 = arith.constant 0 : i32
    return %c0_i32, %c0_i32_0 : i32, i32
  }
  func.func @transform_10(%arg0: i32) -> (i32, i32) {
    %c0_i32 = arith.constant 0 : i32
    %c0_i32_0 = arith.constant 0 : i32
    %c0_i32_1 = arith.constant 0 : i32
    return %c0_i32, %c0_i32_0 : i32, i32
  }
  func.func @transform_11(%arg0: i32) -> (i32, i32) {
    %c0_i32 = arith.constant 0 : i32
    %c0_i32_0 = arith.constant 0 : i32
    %c0_i32_1 = arith.constant 0 : i32
    return %c0_i32, %c0_i32_0 : i32, i32
  }
  func.func @transform_12(%arg0: i32) -> (i32, i32) {
    %c0_i32 = arith.constant 0 : i32
    %c0_i32_0 = arith.constant 0 : i32
    %c0_i32_1 = arith.constant 0 : i32
    return %c0_i32, %c0_i32_0 : i32, i32
  }
  func.func @transform_13(%arg0: i32) -> (i32, i32) {
    %c0_i32 = arith.constant 0 : i32
    %c0_i32_0 = arith.constant 0 : i32
    return %arg0, %c0_i32 : i32, i32
  }
  func.func @transform_14(%arg0: i32) -> (i32, i32, i32) {
    %c0_i32 = arith.constant 0 : i32
    %c0_i32_0 = arith.constant 0 : i32
    %c0_i32_1 = arith.constant 0 : i32
    return %c0_i32, %arg0, %c0_i32_0 : i32, i32, i32
  }
}

</mosaic_0001>

<llo_original>
// kernel: tpu_custom_call.1
$region0: #{tpu_custom_call.1}
  #allocation0 [shape = 'u32[]', space=smem, size = 0x4, offset = 0x4, fixed_abs, tag = 'smem constant byte address 0x4 - core index']
  #allocation1 [shape = 'u32[72,128]{1,0:T(1,128)}', space=vmem, size = 0x9000, scoped, tag = 'internal scratch']
  #allocation2 [shape = 'f32[2,32,4]{2,1,0:T(8,128)}', space=vmem, size = 0x8000, scoped, tag = 'scratch operand']
  #allocation3 [shape = 'f32[32,64]{1,0:T(8,128)}', space=vmem, size = 0x4000, scoped, tag = 'scratch operand']
  #allocation4 [shape = 'f32[2,24,64]{2,1,0:T(8,128)}', space=vmem, size = 0x6000, scoped, tag = 'scratch operand']
  #allocation5 [shape = 'f32[16,128]{1,0:T(8,128)}', space=vmem, size = 0x2000, scoped, tag = 'scratch operand']
  #allocation6 [shape = 'f32[8,128]{1,0:T(8,128)}', space=vmem, size = 0x1000, scoped, tag = 'scratch operand']
  %s0 = inlined_call_operand.vmem [shape: f32[2,16,4], index: 0, kind: input, shape index: {}]
  %s1 = inlined_call_operand.hbm [shape: f32[3,4,64], index: 1, kind: input, shape index: {}]
  %s2 = inlined_call_operand.vmem [shape: f32[1,64], index: 2, kind: input, shape index: {}]
  %s3 = inlined_call_operand.vmem [shape: f32[192,128], index: 3, kind: input, shape index: {}]
  %s4 = inlined_call_operand.vmem [shape: f32[1,128], index: 4, kind: input, shape index: {}]
  %s5 = inlined_call_operand.vmem [shape: f32[128,32], index: 5, kind: input, shape index: {}]
  %s6 = inlined_call_operand.vmem [shape: f32[1,32], index: 6, kind: input, shape index: {}]
  %s7 = inlined_call_operand.hbm [shape: f32[32,128], index: 7, kind: input, shape index: {}]
  %s8 = inlined_call_operand.vmem [shape: f32[1,128], index: 8, kind: input, shape index: {}]
  %s9 = inlined_call_operand.hbm [shape: f32[32,160], index: 9, kind: input, shape index: {}]
  %s10 = inlined_call_operand.vmem [shape: f32[1,32], index: 10, kind: input, shape index: {}]
  %s11 = inlined_call_operand.vmem [shape: f32[32,8], index: 11, kind: input, shape index: {}]
  %s12 = inlined_call_operand.vmem [shape: f32[1,8], index: 12, kind: input, shape index: {}]
  %s13 = inlined_call_operand.hbm [shape: f32[2,8], index: 13, kind: output, shape index: {0}]
  %s14 = inlined_call_operand.hbm [shape: f32[4,2,32], index: 14, kind: output, shape index: {1}]
  %15 = xla_tuple %s13, %s14
  %s16 = sld [smem:[#allocation0]]
  $region82: #{tpu_custom_call.1} parent=0
    _
  %s18 = ssub.s32 1, %s16
  %s19 = scalar_select 0, %s18, %s16
  $region1: #{tpu_custom_call.1} parent=0
    #allocation7 [shape = 'u8[6144]{0}', space=vmem, size = 0x1800, scoped, tag = 'input window, operand 1, single buffered']
    #allocation8 [shape = 's32[1]{0}', space=sflag, size = 0x4, scoped, tag = 'scoped memory for tpu_custom_call.1']
    #allocation9 [shape = 's32[1]{0}', space=sflag, size = 0x4, scoped, tag = 'scoped memory for tpu_custom_call.1']
    #allocation10 [shape = 'u8[16384]{0}', space=vmem, size = 0x4000, scoped, tag = 'input window, operand 7, single buffered']
    #allocation11 [shape = 's32[1]{0}', space=sflag, size = 0x4, scoped, tag = 'scoped memory for tpu_custom_call.1']
    #allocation12 [shape = 'u8[32768]{0}', space=vmem, size = 0x8000, scoped, tag = 'input window, operand 9, single buffered']
    #allocation13 [shape = 'u8[1024]{0}', space=vmem, size = 0x400, scoped, tag = 'output window, operand 0, single buffered']
    #allocation14 [shape = 'u8[4096]{0}', space=vmem, size = 0x1000, scoped, tag = 'output window, operand 1, single buffered']
    #allocation15 [shape = 's32[1]{0}', space=sflag, size = 0x4, scoped, tag = 'scoped memory for tpu_custom_call.1']
    %20 = vsyncpa [#allocation8], 0
    %21 = vsyncpa [#allocation11], 0
    %22 = vsyncpa [#allocation9], 0
    %23 = vsyncpa [#allocation15], 0
    // Predicated region
    $region2: #{tpu_custom_call.1} parent=1 // pred_check
      _
    $region3: #{tpu_custom_call.1} parent=1 // pred_check_branch
      %25 = sbr.rel (0) target = $region5
    $region4: #{tpu_custom_call.1} parent=1 // pred_region
      _
    $region5: #{tpu_custom_call.1} parent=1 // pred_fallthru
      _
    // Predicated region
    $region6: #{tpu_custom_call.1} parent=1 // pred_check
      _
    $region7: #{tpu_custom_call.1} parent=1 // pred_check_branch
      %27 = sbr.rel (0) target = $region9
    $region8: #{tpu_custom_call.1} parent=1 // pred_region
      %29 = vsyncadd [#allocation8], 0
      %s30 = sshll.u32 %s1, 4
      %s31 = int_to_ptr.hbm [resolvable:$true] %s30
      %s32 = sshll.u32 [#allocation7], 4
      %s33 = int_to_ptr.vmem [resolvable:$true] %s32
      %38 = dma.hbm_to_vmem [thread:$0]  %s31, 192, %s33, [#allocation8], 64, 64, 4
    $region9: #{tpu_custom_call.1} parent=1 // pred_fallthru
      _
    // Predicated region
    $region10: #{tpu_custom_call.1} parent=1 // pred_check
      _
    $region11: #{tpu_custom_call.1} parent=1 // pred_check_branch
      %40 = sbr.rel (0) target = $region13
    $region12: #{tpu_custom_call.1} parent=1 // pred_region
      _
    $region13: #{tpu_custom_call.1} parent=1 // pred_fallthru
      _
    // Predicated region
    $region14: #{tpu_custom_call.1} parent=1 // pred_check
      _
    $region15: #{tpu_custom_call.1} parent=1 // pred_check_branch
      %42 = sbr.rel (0) target = $region17
    $region16: #{tpu_custom_call.1} parent=1 // pred_region
      _
    $region17: #{tpu_custom_call.1} parent=1 // pred_fallthru
      _
    // Predicated region
    $region18: #{tpu_custom_call.1} parent=1 // pred_check
      _
    $region19: #{tpu_custom_call.1} parent=1 // pred_check_branch
      %44 = sbr.rel (0) target = $region21
    $region20: #{tpu_custom_call.1} parent=1 // pred_region
      _
    $region21: #{tpu_custom_call.1} parent=1 // pred_fallthru
      _
    // Predicated region
    $region22: #{tpu_custom_call.1} parent=1 // pred_check
      _
    $region23: #{tpu_custom_call.1} parent=1 // pred_check_branch
      %46 = sbr.rel (0) target = $region25
    $region24: #{tpu_custom_call.1} parent=1 // pred_region
      _
    $region25: #{tpu_custom_call.1} parent=1 // pred_fallthru
      _
    // Predicated region
    $region26: #{tpu_custom_call.1} parent=1 // pred_check
      _
    $region27: #{tpu_custom_call.1} parent=1 // pred_check_branch
      %48 = sbr.rel (0) target = $region29
    $region28: #{tpu_custom_call.1} parent=1 // pred_region
      _
    $region29: #{tpu_custom_call.1} parent=1 // pred_fallthru
      _
    // Predicated region
    $region30: #{tpu_custom_call.1} parent=1 // pred_check
      _
    $region31: #{tpu_custom_call.1} parent=1 // pred_check_branch
      %50 = sbr.rel (0) target = $region33
    $region32: #{tpu_custom_call.1} parent=1 // pred_region
      %52 = vsyncadd [#allocation11], 0
      %s53 = sshll.u32 %s7, 4
      %s54 = int_to_ptr.hbm [resolvable:$true] %s53
      %s55 = sshll.u32 [#allocation10], 4
      %s56 = int_to_ptr.vmem [resolvable:$true] %s55
      %61 = dma.hbm_to_vmem [thread:$0]  %s54, 512, %s56, [#allocation11], 128, 128, 8
    $region33: #{tpu_custom_call.1} parent=1 // pred_fallthru
      _
    // Predicated region
    $region34: #{tpu_custom_call.1} parent=1 // pred_check
      _
    $region35: #{tpu_custom_call.1} parent=1 // pred_check_branch
      %63 = sbr.rel (0) target = $region37
    $region36: #{tpu_custom_call.1} parent=1 // pred_region
      _
    $region37: #{tpu_custom_call.1} parent=1 // pred_fallthru
      _
    // Predicated region
    $region38: #{tpu_custom_call.1} parent=1 // pred_check
      _
    $region39: #{tpu_custom_call.1} parent=1 // pred_check_branch
      %65 = sbr.rel (0) target = $region41
    $region40: #{tpu_custom_call.1} parent=1 // pred_region
      %67 = vsyncadd [#allocation11], 0
      %s68 = sshll.u32 %s9, 4
      %s69 = int_to_ptr.hbm [resolvable:$true] %s68
      %s70 = sshll.u32 [#allocation12], 4
      %s71 = int_to_ptr.vmem [resolvable:$true] %s70
      %76 = dma.hbm_to_vmem [thread:$0]  %s69, 1024, %s71, [#allocation11], 256, 256, 16
    $region41: #{tpu_custom_call.1} parent=1 // pred_fallthru
      _
    // Predicated region
    $region42: #{tpu_custom_call.1} parent=1 // pred_check
      _
    $region43: #{tpu_custom_call.1} parent=1 // pred_check_branch
      %78 = sbr.rel (0) target = $region45
    $region44: #{tpu_custom_call.1} parent=1 // pred_region
      _
    $region45: #{tpu_custom_call.1} parent=1 // pred_fallthru
      _
    // Predicated region
    $region46: #{tpu_custom_call.1} parent=1 // pred_check
      _
    $region47: #{tpu_custom_call.1} parent=1 // pred_check_branch
      %80 = sbr.rel (0) target = $region49
    $region48: #{tpu_custom_call.1} parent=1 // pred_region
      _
    $region49: #{tpu_custom_call.1} parent=1 // pred_fallthru
      _
    // Predicated region
    $region50: #{tpu_custom_call.1} parent=1 // pred_check
      _
    $region51: #{tpu_custom_call.1} parent=1 // pred_check_branch
      %82 = sbr.rel (0) target = $region53
    $region52: #{tpu_custom_call.1} parent=1 // pred_region
      _
    $region53: #{tpu_custom_call.1} parent=1 // pred_fallthru
      _
    // Predicated region
    $region54: #{tpu_custom_call.1} parent=1 // pred_check
      _
    $region55: #{tpu_custom_call.1} parent=1 // pred_check_branch
      %84 = sbr.rel (0) target = $region57
    $region56: #{tpu_custom_call.1} parent=1 // pred_region
      %86 = dma.done [#allocation8], 192
    $region57: #{tpu_custom_call.1} parent=1 // pred_fallthru
      _
    // Predicated region
    $region58: #{tpu_custom_call.1} parent=1 // pred_check
      _
    $region59: #{tpu_custom_call.1} parent=1 // pred_check_branch
      %88 = sbr.rel (0) target = $region61
    $region60: #{tpu_custom_call.1} parent=1 // pred_region
      %90 = dma.done [#allocation11], 512
    $region61: #{tpu_custom_call.1} parent=1 // pred_fallthru
      _
    // Predicated region
    $region62: #{tpu_custom_call.1} parent=1 // pred_check
      _
    $region63: #{tpu_custom_call.1} parent=1 // pred_check_branch
      %92 = sbr.rel (0) target = $region65
    $region64: #{tpu_custom_call.1} parent=1 // pred_region
      %94 = dma.done [#allocation11], 1024
    $region65: #{tpu_custom_call.1} parent=1 // pred_fallthru
      _
    %v95 = vld [vmem:[%s0] sm:$0xff]
    %v96 = vld [vmem:[%s0 + $0x8] sm:$0xff]
    %v97 = vld [vmem:[%s0 + $0x10] sm:$0xff]
    %v98 = vld [vmem:[%s0 + $0x18] sm:$0xff]
    %vm99 = vcmask 24576
    %100 = vst.msk [vmem:[#allocation2 + $0x7] sm:$0x1] %vm99, 0.0
    %101 = vst.msk [vmem:[#allocation2 + $0x27] sm:$0x1] %vm99, 0.0
    %102 = vst.msk [vmem:[#allocation2 + $0x18] sm:$0x1] %vm99, 0.0
    %103 = vst.msk [vmem:[#allocation2 + $0x38] sm:$0x1] %vm99, 0.0
    %vm104 = vcmask 31744
    %105 = vst.msk [vmem:[#allocation2 + $0x8] sm:$0xff] %vm104, %v95
    %106 = vst.msk [vmem:[#allocation2 + $0x10] sm:$0xff] %vm104, %v96
    %107 = vst.msk [vmem:[#allocation2 + $0x28] sm:$0xff] %vm104, %v97
    %108 = vst.msk [vmem:[#allocation2 + $0x30] sm:$0xff] %vm104, %v98
    %v109 = vld [vmem:[#allocation2 + $0x7] sm:$0xff]
    %v110 = vld [vmem:[#allocation2 + $0xf] sm:$0xff]
    %v111 = vld [vmem:[#allocation2 + $0x27] sm:$0xff]
    %v112 = vld [vmem:[#allocation2 + $0x2f] sm:$0xff]
    %v113 = vld [vmem:[#allocation2 + $0x9] sm:$0xff]
    %v114 = vld [vmem:[#allocation2 + $0x11] sm:$0xff]
    %v115 = vld [vmem:[#allocation2 + $0x29] sm:$0xff]
    %v116 = vld [vmem:[#allocation2 + $0x31] sm:$0xff]
    %v117 = vld [vmem:[#allocation7] sm:$0xf]
    %s118 = scalar_lea.vmem [#allocation7], 4
    %v119 = vld [vmem:[%s118] sm:$0xf]
    %v121 = vsel %vm104, %v95, 0
    %v124 = vsel %vm104, %v96, 0
    %v127 = vsel %vm104, %v97, 0
    %v130 = vsel %vm104, %v98, 0
    %vm132 = vcmask 1043456
    %v134 = vsel %vm132, %v119, 0
    %136 = vmatpush.msra.mxu0 0.0
    %137 = vmatpush.msra.mxu0 0.0
    %138 = vmatpush.msra.mxu0 0.0
    %139 = vmatpush.msra.mxu0 0.0
    %140 = vmatpush.msra.mxu0 0.0
    %141 = vmatpush.msra.mxu0 0.0
    %142 = vmatpush.msra.mxu0 0.0
    %143 = vmatpush.msra.mxu0 0.0
    %144 = vmatpush.msra.mxu0 0.0
    %145 = vmatpush.msra.mxu0 0.0
    %146 = vmatpush.msra.mxu0 0.0
    %147 = vmatpush.msra.mxu0 0.0
    %148 = vmatpush.msra.mxu0 0.0
    %149 = vmatpush.msra.mxu0 0.0
    %150 = vmatpush.msra.mxu0 0.0
    %151 = vmatpush.msra.mxu0 %v134
    %152 = vmatmul.f32.gmra.mxu0 %v121
    %v153 = vpop.f32.mrf.mxu0
    %v154 = vadd.f32 0.0, %v153
    %155 = vmatmul.f32.gmra.mxu0 %v124
    %v156 = vpop.f32.mrf.mxu0
    %v157 = vadd.f32 0.0, %v156
    %158 = vmatmul.f32.gmra.mxu0 %v127
    %v159 = vpop.f32.mrf.mxu0
    %v160 = vadd.f32 0.0, %v159
    %161 = vmatmul.f32.gmra.mxu0 %v130
    %v162 = vpop.f32.mrf.mxu0
    %v163 = vadd.f32 0.0, %v162
    %164 = vdwg.mxu0
    %v166 = vsel %vm104, %v109, 0
    %v169 = vsel %vm104, %v110, 0
    %v172 = vsel %vm104, %v111, 0
    %v175 = vsel %vm104, %v112, 0
    %v178 = vsel %vm132, %v117, 0
    %180 = vmatpush.msra.mxu0 0.0
    %181 = vmatpush.msra.mxu0 0.0
    %182 = vmatpush.msra.mxu0 0.0
    %183 = vmatpush.msra.mxu0 0.0
    %184 = vmatpush.msra.mxu0 0.0
    %185 = vmatpush.msra.mxu0 0.0
    %186 = vmatpush.msra.mxu0 0.0
    %187 = vmatpush.msra.mxu0 0.0
    %188 = vmatpush.msra.mxu0 0.0
    %189 = vmatpush.msra.mxu0 0.0
    %190 = vmatpush.msra.mxu0 0.0
    %191 = vmatpush.msra.mxu0 0.0
    %192 = vmatpush.msra.mxu0 0.0
    %193 = vmatpush.msra.mxu0 0.0
    %194 = vmatpush.msra.mxu0 0.0
    %195 = vmatpush.msra.mxu0 %v178
    %196 = vmatmul.f32.gmra.mxu0 %v166
    %v197 = vpop.f32.mrf.mxu0
    %v198 = vadd.f32 %v154, %v197
    %199 = vmatmul.f32.gmra.mxu0 %v169
    %v200 = vpop.f32.mrf.mxu0
    %v201 = vadd.f32 %v157, %v200
    %202 = vmatmul.f32.gmra.mxu0 %v172
    %v203 = vpop.f32.mrf.mxu0
    %v204 = vadd.f32 %v160, %v203
    %205 = vmatmul.f32.gmra.mxu0 %v175
    %v206 = vpop.f32.mrf.mxu0
    %v207 = vadd.f32 %v163, %v206
    %208 = vdwg.mxu0
    %s209 = scalar_lea.vmem [#allocation7], 8
    %v210 = vld [vmem:[%s209] sm:$0xf]
    %v212 = vsel %vm104, %v113, 0
    %v215 = vsel %vm104, %v114, 0
    %v218 = vsel %vm104, %v115, 0
    %v221 = vsel %vm104, %v116, 0
    %v224 = vsel %vm132, %v210, 0
    %226 = vmatpush.msra.mxu0 0.0
    %227 = vmatpush.msra.mxu0 0.0
    %228 = vmatpush.msra.mxu0 0.0
    %229 = vmatpush.msra.mxu0 0.0
    %230 = vmatpush.msra.mxu0 0.0
    %231 = vmatpush.msra.mxu0 0.0
    %232 = vmatpush.msra.mxu0 0.0
    %233 = vmatpush.msra.mxu0 0.0
    %234 = vmatpush.msra.mxu0 0.0
    %235 = vmatpush.msra.mxu0 0.0
    %236 = vmatpush.msra.mxu0 0.0
    %237 = vmatpush.msra.mxu0 0.0
    %238 = vmatpush.msra.mxu0 0.0
    %239 = vmatpush.msra.mxu0 0.0
    %240 = vmatpush.msra.mxu0 0.0
    %241 = vmatpush.msra.mxu0 %v224
    %242 = vmatmul.f32.gmra.mxu0 %v212
    %v243 = vpop.f32.mrf.mxu0
    %v244 = vadd.f32 0.0, %v243
    %245 = vmatmul.f32.gmra.mxu0 %v215
    %v246 = vpop.f32.mrf.mxu0
    %v247 = vadd.f32 0.0, %v246
    %248 = vmatmul.f32.gmra.mxu0 %v218
    %v249 = vpop.f32.mrf.mxu0
    %v250 = vadd.f32 0.0, %v249
    %251 = vmatmul.f32.gmra.mxu0 %v221
    %v252 = vpop.f32.mrf.mxu0
    %v253 = vadd.f32 0.0, %v252
    %254 = vdwg.mxu0
    %v255 = vadd.f32 %v198, %v244
    %v256 = vadd.f32 %v201, %v247
    %v257 = vadd.f32 %v204, %v250
    %v258 = vadd.f32 %v207, %v253
    %v259 = vld [vmem:[%s2] sm:$0x1]
    %v261 = vperm.slane %v259, 0
    %v263 = vadd.f32 %v255, %v261
    %v264 = vadd.f32 %v256, %v261
    %v265 = vadd.f32 %v257, %v261
    %v266 = vadd.f32 %v258, %v261
    %v267 = vmax.f32 %v263, 0.0
    %v268 = vmax.f32 %v264, 0.0
    %v269 = vmax.f32 %v265, 0.0
    %v270 = vmax.f32 %v266, 0.0
    %vm271 = vcmask 523264
    %272 = vst.msk [vmem:[#allocation3] sm:$0xff] %vm271, %v267
    %273 = vst.msk [vmem:[#allocation3 + $0x8] sm:$0xff] %vm271, %v268
    %274 = vst.msk [vmem:[#allocation3 + $0x10] sm:$0xff] %vm271, %v269
    %275 = vst.msk [vmem:[#allocation3 + $0x18] sm:$0xff] %vm271, %v270
    %v276 = vld [vmem:[#allocation3] ss:$2 sm:$0xff]
    %s277 = scalar_lea.vmem [#allocation3], 16
    %v278 = vld [vmem:[%s277] ss:$2 sm:$0xff]
    %s279 = scalar_lea.vmem [#allocation3], 1
    %v280 = vld [vmem:[%s279] ss:$2 sm:$0xff]
    %s281 = scalar_lea.vmem [#allocation3], 17
    %v282 = vld [vmem:[%s281] ss:$2 sm:$0xff]
    %v283 = vmax.f32 %v276, %v280
    %v284 = vmax.f32 %v278, %v282
    %vm285 = vcmask 516096
    %286 = vst.msk [vmem:[#allocation4 + $0x7] sm:$0x1] %vm285, 0.0
    %287 = vst.msk [vmem:[#allocation4 + $0x1f] sm:$0x1] %vm285, 0.0
    %288 = vst.msk [vmem:[#allocation4 + $0x10] sm:$0x1] %vm285, 0.0
    %289 = vst.msk [vmem:[#allocation4 + $0x28] sm:$0x1] %vm285, 0.0
    %290 = vst.msk [vmem:[#allocation4 + $0x8] sm:$0xff] %vm271, %v283
    %291 = vst.msk [vmem:[#allocation4 + $0x20] sm:$0xff] %vm271, %v284
    %v292 = vld [vmem:[#allocation4 + $0x7] sm:$0xff]
    %v293 = vld [vmem:[#allocation4 + $0x1f] sm:$0xff]
    %v294 = vld [vmem:[#allocation4 + $0x9] sm:$0xff]
    %v295 = vld [vmem:[#allocation4 + $0x21] sm:$0xff]
    %298 = vrot.lane.b32.xlu0 %v283, 64
    %v299 = vpop.permute.xlu0 %298
    %300 = vrot.lane.b32.xlu0 %v284, 64
    %v301 = vpop.permute.xlu0 %300
    %v304 = vsel %vm271, %v292, %v299
    %v305 = vsel %vm271, %v293, %v301
    %v306 = vld [vmem:[%s3] sm:$0xff]
    %v307 = vld [vmem:[%s3 + $0x8] sm:$0xff]
    %v308 = vld [vmem:[%s3 + $0x10] sm:$0xff]
    %v309 = vld [vmem:[%s3 + $0x18] sm:$0xff]
    %v310 = vld [vmem:[%s3 + $0x20] sm:$0xff]
    %v311 = vld [vmem:[%s3 + $0x28] sm:$0xff]
    %v312 = vld [vmem:[%s3 + $0x30] sm:$0xff]
    %v313 = vld [vmem:[%s3 + $0x38] sm:$0xff]
    %v314 = vld [vmem:[%s3 + $0x40] sm:$0xff]
    %v315 = vld [vmem:[%s3 + $0x48] sm:$0xff]
    %v316 = vld [vmem:[%s3 + $0x50] sm:$0xff]
    %v317 = vld [vmem:[%s3 + $0x58] sm:$0xff]
    %v318 = vld [vmem:[%s3 + $0x60] sm:$0xff]
    %v319 = vld [vmem:[%s3 + $0x68] sm:$0xff]
    %v320 = vld [vmem:[%s3 + $0x70] sm:$0xff]
    %v321 = vld [vmem:[%s3 + $0x78] sm:$0xff]
    %v322 = vld [vmem:[%s3 + $0x80] sm:$0xff]
    %v323 = vld [vmem:[%s3 + $0x88] sm:$0xff]
    %v324 = vld [vmem:[%s3 + $0x90] sm:$0xff]
    %v325 = vld [vmem:[%s3 + $0x98] sm:$0xff]
    %v326 = vld [vmem:[%s3 + $0xa0] sm:$0xff]
    %v327 = vld [vmem:[%s3 + $0xa8] sm:$0xff]
    %v328 = vld [vmem:[%s3 + $0xb0] sm:$0xff]
    %v329 = vld [vmem:[%s3 + $0xb8] sm:$0xff]
    %v330 = vld [vmem:[%s4] sm:$0x1]
    %v332 = vperm.slane %v330, 0
    %v335 = vsel %vm271, %v294, 0
    %v338 = vsel %vm271, %v295, 0
    %340 = vmatpush.msra.mxu0 %v321
    %341 = vmatpush.msra.mxu0 %v320
    %342 = vmatpush.msra.mxu0 %v319
    %343 = vmatpush.msra.mxu0 %v318
    %344 = vmatpush.msra.mxu0 %v317
    %345 = vmatpush.msra.mxu0 %v316
    %346 = vmatpush.msra.mxu0 %v315
    %347 = vmatpush.msra.mxu0 %v314
    %348 = vmatpush.msra.mxu0 %v313
    %349 = vmatpush.msra.mxu0 %v312
    %350 = vmatpush.msra.mxu0 %v311
    %351 = vmatpush.msra.mxu0 %v310
    %352 = vmatpush.msra.mxu0 %v309
    %353 = vmatpush.msra.mxu0 %v308
    %354 = vmatpush.msra.mxu0 %v307
    %355 = vmatpush.msra.mxu0 %v306
    %356 = vmatmul.f32.gmra.mxu0 %v304
    %v357 = vpop.f32.mrf.mxu0
    %v358 = vadd.f32 %v332, %v357
    %359 = vmatmul.f32.gmra.mxu0 %v305
    %v360 = vpop.f32.mrf.mxu0
    %v361 = vadd.f32 %v332, %v360
    %362 = vdwg.mxu0
    %363 = vmatpush.msra.mxu0 0.0
    %364 = vmatpush.msra.mxu0 0.0
    %365 = vmatpush.msra.mxu0 0.0
    %366 = vmatpush.msra.mxu0 0.0
    %367 = vmatpush.msra.mxu0 0.0
    %368 = vmatpush.msra.mxu0 0.0
    %369 = vmatpush.msra.mxu0 0.0
    %370 = vmatpush.msra.mxu0 0.0
    %371 = vmatpush.msra.mxu0 %v329
    %372 = vmatpush.msra.mxu0 %v328
    %373 = vmatpush.msra.mxu0 %v327
    %374 = vmatpush.msra.mxu0 %v326
    %375 = vmatpush.msra.mxu0 %v325
    %376 = vmatpush.msra.mxu0 %v324
    %377 = vmatpush.msra.mxu0 %v323
    %378 = vmatpush.msra.mxu0 %v322
    %379 = vmatmul.f32.gmra.mxu0 %v335
    %v380 = vpop.f32.mrf.mxu0
    %v381 = vadd.f32 %v358, %v380
    %382 = vmatmul.f32.gmra.mxu0 %v338
    %v383 = vpop.f32.mrf.mxu0
    %v384 = vadd.f32 %v361, %v383
    %385 = vdwg.mxu0
    %v386 = vmax.f32 %v381, 0.0
    %v387 = vmax.f32 %v384, 0.0
    %388 = vst [vmem:[#allocation5] sm:$0xff] %v386
    %389 = vst [vmem:[#allocation5 + $0x8] sm:$0xff] %v387
    %v390 = vld [vmem:[#allocation5] ss:$2 sm:$0xff]
    %s391 = scalar_lea.vmem [#allocation5], 1
    %v392 = vld [vmem:[%s391] ss:$2 sm:$0xff]
    %v393 = vmax.f32 %v390, %v392
    %v394 = vld [vmem:[%s5] sm:$0xff]
    %v395 = vld [vmem:[%s5 + $0x8] sm:$0xff]
    %v396 = vld [vmem:[%s5 + $0x10] sm:$0xff]
    %v397 = vld [vmem:[%s5 + $0x18] sm:$0xff]
    %v398 = vld [vmem:[%s5 + $0x20] sm:$0xff]
    %v399 = vld [vmem:[%s5 + $0x28] sm:$0xff]
    %v400 = vld [vmem:[%s5 + $0x30] sm:$0xff]
    %v401 = vld [vmem:[%s5 + $0x38] sm:$0xff]
    %v402 = vld [vmem:[%s5 + $0x40] sm:$0xff]
    %v403 = vld [vmem:[%s5 + $0x48] sm:$0xff]
    %v404 = vld [vmem:[%s5 + $0x50] sm:$0xff]
    %v405 = vld [vmem:[%s5 + $0x58] sm:$0xff]
    %v406 = vld [vmem:[%s5 + $0x60] sm:$0xff]
    %v407 = vld [vmem:[%s5 + $0x68] sm:$0xff]
    %v408 = vld [vmem:[%s5 + $0x70] sm:$0xff]
    %v409 = vld [vmem:[%s5 + $0x78] sm:$0xff]
    %v410 = vld [vmem:[%s6] sm:$0x1]
    %v412 = vperm.slane %v410, 0
    %414 = vmatpush.msra.mxu0 %v409
    %415 = vmatpush.msra.mxu0 %v408
    %416 = vmatpush.msra.mxu0 %v407
    %417 = vmatpush.msra.mxu0 %v406
    %418 = vmatpush.msra.mxu0 %v405
    %419 = vmatpush.msra.mxu0 %v404
    %420 = vmatpush.msra.mxu0 %v403
    %421 = vmatpush.msra.mxu0 %v402
    %422 = vmatpush.msra.mxu0 %v401
    %423 = vmatpush.msra.mxu0 %v400
    %424 = vmatpush.msra.mxu0 %v399
    %425 = vmatpush.msra.mxu0 %v398
    %426 = vmatpush.msra.mxu0 %v397
    %427 = vmatpush.msra.mxu0 %v396
    %428 = vmatpush.msra.mxu0 %v395
    %429 = vmatpush.msra.mxu0 %v394
    %430 = vmatmul.f32.gmra.mxu0 %v393
    %v431 = vpop.f32.mrf.mxu0
    %v432 = vadd.f32 %v412, %v431
    %433 = vdwg.mxu0
    %v434 = vld [vmem:[#allocation10] sm:$0xff]
    %v435 = vld [vmem:[#allocation10 + $0x8] sm:$0xff]
    %v436 = vld [vmem:[#allocation10 + $0x10] sm:$0xff]
    %v437 = vld [vmem:[#allocation10 + $0x18] sm:$0xff]
    %v438 = vld [vmem:[%s8] sm:$0x1]
    %v440 = vperm.slane %v438, 0
    %vm442 = vcmask 261120
    %v444 = vsel %vm442, %v432, 0
    %446 = vmatpush.msra.mxu0 0.0
    %447 = vmatpush.msra.mxu0 0.0
    %448 = vmatpush.msra.mxu0 0.0
    %449 = vmatpush.msra.mxu0 0.0
    %450 = vmatpush.msra.mxu0 0.0
    %451 = vmatpush.msra.mxu0 0.0
    %452 = vmatpush.msra.mxu0 0.0
    %453 = vmatpush.msra.mxu0 0.0
    %454 = vmatpush.msra.mxu0 0.0
    %455 = vmatpush.msra.mxu0 0.0
    %456 = vmatpush.msra.mxu0 0.0
    %457 = vmatpush.msra.mxu0 0.0
    %458 = vmatpush.msra.mxu0 %v437
    %459 = vmatpush.msra.mxu0 %v436
    %460 = vmatpush.msra.mxu0 %v435
    %461 = vmatpush.msra.mxu0 %v434
    %462 = vmatmul.f32.gmra.mxu0 %v444
    %v463 = vpop.f32.mrf.mxu0
    %v464 = vadd.f32 %v440, %v463
    %465 = vdwg.mxu0
    %466 = vst [vmem:[#allocation6] sm:$0xff] %v464
    %v467 = vld [vmem:[#allocation6] ss:$4 sm:$0x3]
    %v468 = vadd.f32 %v467, 0.0
    %v469 = vxor.u32 %v468, 2147483648
    %v470 = vmul.f32 %v469, 1.442695
    %v471 = vpow.pop %v470
    %v472 = vadd.f32 %v471, 1.0
    %v473 = vrcp.pop %v472
    %v474 = vmul.f32 %v472, %v473
    %v475 = vsub.f32 1.0, %v474
    %v476 = vmul.f32 %v473, %v475
    %v477 = vadd.f32 %v473, %v476
    %vm478 = vweird.f32 %v472
    %vm479 = vweird.f32 %v473
    %vm480 = vmor %vm478, %vm479
    %v481 = vsel %vm480, %v473, %v477
    %v482 = vand.u32 2147483647, %v472
    %vm483 = vcmp.eq.f32.partialorder %v482, 8.507059e+37
    %v484 = vand.u32 %v472, 2147483648
    %v485 = vor.u32 1.1754944e-38, %v484
    %v486 = vsel %vm483, %v485, %v481
    %v487 = vmul.f32 1.0, %v486
    %v488 = vtanh.pop %v468
    %v489 = vmul.f32 %v487, 0.0
    %491 = vrot.lane.b32.xlu0 %v488, 64
    %v492 = vpop.permute.xlu0 %491
    %v494 = vmul.f32 %v487, %v492
    %496 = vrot.lane.b32.xlu0 %v494, 32
    %v497 = vpop.permute.xlu0 %496
    %v499 = vadd.f32 %v489, %v497
    %v500 = vtanh.pop %v499
    %502 = vrot.lane.b32.xlu0 %v500, 64
    %v503 = vpop.permute.xlu0 %502
    %v505 = vmul.f32 %v487, %v503
    %v506 = vld [vmem:[#allocation12] sm:$0xff]
    %v507 = vld [vmem:[#allocation12 + $0x8] sm:$0xff]
    %v508 = vld [vmem:[#allocation12 + $0x10] sm:$0xff]
    %v509 = vld [vmem:[#allocation12 + $0x18] sm:$0xff]
    %v510 = vld [vmem:[#allocation12 + $0x20] sm:$0xff]
    %v511 = vld [vmem:[#allocation12 + $0x28] sm:$0xff]
    %v512 = vld [vmem:[#allocation12 + $0x30] sm:$0xff]
    %v513 = vld [vmem:[#allocation12 + $0x38] sm:$0xff]
    %515 = vrot.lane.b32.xlu0 %v505, 32
    %v516 = vpop.permute.xlu0 %515
    %v517 = vsel %vm442, %v516, 0
    %519 = vmatpush.msra.mxu0 0.0
    %520 = vmatpush.msra.mxu0 0.0
    %521 = vmatpush.msra.mxu0 0.0
    %522 = vmatpush.msra.mxu0 0.0
    %523 = vmatpush.msra.mxu0 0.0
    %524 = vmatpush.msra.mxu0 0.0
    %525 = vmatpush.msra.mxu0 0.0
    %526 = vmatpush.msra.mxu0 0.0
    %527 = vmatpush.msra.mxu0 0.0
    %528 = vmatpush.msra.mxu0 0.0
    %529 = vmatpush.msra.mxu0 0.0
    %530 = vmatpush.msra.mxu0 0.0
    %531 = vmatpush.msra.mxu0 %v512
    %532 = vmatpush.msra.mxu0 %v510
    %533 = vmatpush.msra.mxu0 %v508
    %534 = vmatpush.msra.mxu0 %v506
    %535 = vmatmul.f32.gmra.mxu0 %v517
    %v536 = vpop.f32.mrf.mxu0
    %v537 = vadd.f32 0.0, %v536
    %538 = vdwg.mxu0
    %539 = vmatpush.msra.mxu0 0.0
    %540 = vmatpush.msra.mxu0 0.0
    %541 = vmatpush.msra.mxu0 0.0
    %542 = vmatpush.msra.mxu0 0.0
    %543 = vmatpush.msra.mxu0 0.0
    %544 = vmatpush.msra.mxu0 0.0
    %545 = vmatpush.msra.mxu0 0.0
    %546 = vmatpush.msra.mxu0 0.0
    %547 = vmatpush.msra.mxu0 0.0
    %548 = vmatpush.msra.mxu0 0.0
    %549 = vmatpush.msra.mxu0 0.0
    %550 = vmatpush.msra.mxu0 0.0
    %551 = vmatpush.msra.mxu0 %v513
    %552 = vmatpush.msra.mxu0 %v511
    %553 = vmatpush.msra.mxu0 %v509
    %554 = vmatpush.msra.mxu0 %v507
    %555 = vmatmul.f32.gmra.mxu0 %v517
    %v556 = vpop.f32.mrf.mxu0
    %v557 = vadd.f32 0.0, %v556
    %558 = vdwg.mxu0
    %v559 = vld [vmem:[%s10] sm:$0x1]
    %v561 = vperm.slane %v559, 0
    %v563 = vadd.f32 %v557, %v561
    %s564 = scalar_lea.vmem [#allocation6], 1
    %v565 = vld [vmem:[%s564] ss:$4 sm:$0x3]
    %v566 = vadd.f32 %v565, %v537
    %v567 = vxor.u32 %v566, 2147483648
    %v568 = vmul.f32 %v567, 1.442695
    %v569 = vpow.pop %v568
    %v570 = vadd.f32 %v569, 1.0
    %v571 = vrcp.pop %v570
    %v572 = vmul.f32 %v570, %v571
    %v573 = vsub.f32 1.0, %v572
    %v574 = vmul.f32 %v571, %v573
    %v575 = vadd.f32 %v571, %v574
    %vm576 = vweird.f32 %v570
    %vm577 = vweird.f32 %v571
    %vm578 = vmor %vm576, %vm577
    %v579 = vsel %vm578, %v571, %v575
    %v580 = vand.u32 2147483647, %v570
    %vm581 = vcmp.eq.f32.partialorder %v580, 8.507059e+37
    %v582 = vand.u32 %v570, 2147483648
    %v583 = vor.u32 1.1754944e-38, %v582
    %v584 = vsel %vm581, %v583, %v579
    %v585 = vmul.f32 1.0, %v584
    %v586 = vtanh.pop %v566
    %v587 = vmul.f32 %v585, %v499
    %589 = vrot.lane.b32.xlu0 %v586, 64
    %v590 = vpop.permute.xlu0 %589
    %v592 = vmul.f32 %v585, %v590
    %594 = vrot.lane.b32.xlu0 %v592, 32
    %v595 = vpop.permute.xlu0 %594
    %v597 = vadd.f32 %v587, %v595
    %v598 = vtanh.pop %v597
    %600 = vrot.lane.b32.xlu0 %v598, 64
    %v601 = vpop.permute.xlu0 %600
    %v603 = vmul.f32 %v585, %v601
    %605 = vrot.lane.b32.xlu0 %v603, 32
    %v606 = vpop.permute.xlu0 %605
    %v607 = vsel %vm442, %v606, 0
    %609 = vmatpush.msra.mxu0 0.0
    %610 = vmatpush.msra.mxu0 0.0
    %611 = vmatpush.msra.mxu0 0.0
    %612 = vmatpush.msra.mxu0 0.0
    %613 = vmatpush.msra.mxu0 0.0
    %614 = vmatpush.msra.mxu0 0.0
    %615 = vmatpush.msra.mxu0 0.0
    %616 = vmatpush.msra.mxu0 0.0
    %617 = vmatpush.msra.mxu0 0.0
    %618 = vmatpush.msra.mxu0 0.0
    %619 = vmatpush.msra.mxu0 0.0
    %620 = vmatpush.msra.mxu0 0.0
    %621 = vmatpush.msra.mxu0 %v512
    %622 = vmatpush.msra.mxu0 %v510
    %623 = vmatpush.msra.mxu0 %v508
    %624 = vmatpush.msra.mxu0 %v506
    %625 = vmatmul.f32.gmra.mxu0 %v607
    %v626 = vpop.f32.mrf.mxu0
    %v627 = vadd.f32 0.0, %v626
    %628 = vdwg.mxu0
    %629 = vmatpush.msra.mxu0 0.0
    %630 = vmatpush.msra.mxu0 0.0
    %631 = vmatpush.msra.mxu0 0.0
    %632 = vmatpush.msra.mxu0 0.0
    %633 = vmatpush.msra.mxu0 0.0
    %634 = vmatpush.msra.mxu0 0.0
    %635 = vmatpush.msra.mxu0 0.0
    %636 = vmatpush.msra.mxu0 0.0
    %637 = vmatpush.msra.mxu0 0.0
    %638 = vmatpush.msra.mxu0 0.0
    %639 = vmatpush.msra.mxu0 0.0
    %640 = vmatpush.msra.mxu0 0.0
    %641 = vmatpush.msra.mxu0 %v513
    %642 = vmatpush.msra.mxu0 %v511
    %643 = vmatpush.msra.mxu0 %v509
    %644 = vmatpush.msra.mxu0 %v507
    %645 = vmatmul.f32.gmra.mxu0 %v607
    %v646 = vpop.f32.mrf.mxu0
    %v647 = vadd.f32 0.0, %v646
    %648 = vdwg.mxu0
    %v649 = vadd.f32 %v647, %v561
    %s650 = scalar_lea.vmem [#allocation6], 2
    %v651 = vld [vmem:[%s650] ss:$4 sm:$0x3]
    %v652 = vadd.f32 %v651, %v627
    %v653 = vxor.u32 %v652, 2147483648
    %v654 = vmul.f32 %v653, 1.442695
    %v655 = vpow.pop %v654
    %v656 = vadd.f32 %v655, 1.0
    %v657 = vrcp.pop %v656
    %v658 = vmul.f32 %v656, %v657
    %v659 = vsub.f32 1.0, %v658
    %v660 = vmul.f32 %v657, %v659
    %v661 = vadd.f32 %v657, %v660
    %vm662 = vweird.f32 %v656
    %vm663 = vweird.f32 %v657
    %vm664 = vmor %vm662, %vm663
    %v665 = vsel %vm664, %v657, %v661
    %v666 = vand.u32 2147483647, %v656
    %vm667 = vcmp.eq.f32.partialorder %v666, 8.507059e+37
    %v668 = vand.u32 %v656, 2147483648
    %v669 = vor.u32 1.1754944e-38, %v668
    %v670 = vsel %vm667, %v669, %v665
    %v671 = vmul.f32 1.0, %v670
    %v672 = vtanh.pop %v652
    %v673 = vmul.f32 %v671, %v597
    %675 = vrot.lane.b32.xlu0 %v672, 64
    %v676 = vpop.permute.xlu0 %675
    %v678 = vmul.f32 %v671, %v676
    %680 = vrot.lane.b32.xlu0 %v678, 32
    %v681 = vpop.permute.xlu0 %680
    %v683 = vadd.f32 %v673, %v681
    %v684 = vtanh.pop %v683
    %686 = vrot.lane.b32.xlu0 %v684, 64
    %v687 = vpop.permute.xlu0 %686
    %v689 = vmul.f32 %v671, %v687
    %691 = vrot.lane.b32.xlu0 %v689, 32
    %v692 = vpop.permute.xlu0 %691
    %v693 = vsel %vm442, %v692, 0
    %695 = vmatpush.msra.mxu0 0.0
    %696 = vmatpush.msra.mxu0 0.0
    %697 = vmatpush.msra.mxu0 0.0
    %698 = vmatpush.msra.mxu0 0.0
    %699 = vmatpush.msra.mxu0 0.0
    %700 = vmatpush.msra.mxu0 0.0
    %701 = vmatpush.msra.mxu0 0.0
    %702 = vmatpush.msra.mxu0 0.0
    %703 = vmatpush.msra.mxu0 0.0
    %704 = vmatpush.msra.mxu0 0.0
    %705 = vmatpush.msra.mxu0 0.0
    %706 = vmatpush.msra.mxu0 0.0
    %707 = vmatpush.msra.mxu0 %v512
    %708 = vmatpush.msra.mxu0 %v510
    %709 = vmatpush.msra.mxu0 %v508
    %710 = vmatpush.msra.mxu0 %v506
    %711 = vmatmul.f32.gmra.mxu0 %v693
    %v712 = vpop.f32.mrf.mxu0
    %v713 = vadd.f32 0.0, %v712
    %714 = vdwg.mxu0
    %715 = vmatpush.msra.mxu0 0.0
    %716 = vmatpush.msra.mxu0 0.0
    %717 = vmatpush.msra.mxu0 0.0
    %718 = vmatpush.msra.mxu0 0.0
    %719 = vmatpush.msra.mxu0 0.0
    %720 = vmatpush.msra.mxu0 0.0
    %721 = vmatpush.msra.mxu0 0.0
    %722 = vmatpush.msra.mxu0 0.0
    %723 = vmatpush.msra.mxu0 0.0
    %724 = vmatpush.msra.mxu0 0.0
    %725 = vmatpush.msra.mxu0 0.0
    %726 = vmatpush.msra.mxu0 0.0
    %727 = vmatpush.msra.mxu0 %v513
    %728 = vmatpush.msra.mxu0 %v511
    %729 = vmatpush.msra.mxu0 %v509
    %730 = vmatpush.msra.mxu0 %v507
    %731 = vmatmul.f32.gmra.mxu0 %v693
    %v732 = vpop.f32.mrf.mxu0
    %v733 = vadd.f32 0.0, %v732
    %734 = vdwg.mxu0
    %v735 = vadd.f32 %v733, %v561
    %s736 = scalar_lea.vmem [#allocation6], 3
    %v737 = vld [vmem:[%s736] ss:$4 sm:$0x3]
    %v738 = vadd.f32 %v737, %v713
    %v739 = vxor.u32 %v738, 2147483648
    %v740 = vmul.f32 %v739, 1.442695
    %v741 = vpow.pop %v740
    %v742 = vadd.f32 %v741, 1.0
    %v743 = vrcp.pop %v742
    %v744 = vmul.f32 %v742, %v743
    %v745 = vsub.f32 1.0, %v744
    %v746 = vmul.f32 %v743, %v745
    %v747 = vadd.f32 %v743, %v746
    %vm748 = vweird.f32 %v742
    %vm749 = vweird.f32 %v743
    %vm750 = vmor %vm748, %vm749
    %v751 = vsel %vm750, %v743, %v747
    %v752 = vand.u32 2147483647, %v742
    %vm753 = vcmp.eq.f32.partialorder %v752, 8.507059e+37
    %v754 = vand.u32 %v742, 2147483648
    %v755 = vor.u32 1.1754944e-38, %v754
    %v756 = vsel %vm753, %v755, %v751
    %v757 = vmul.f32 1.0, %v756
    %v758 = vtanh.pop %v738
    %v759 = vmul.f32 %v757, %v683
    %761 = vrot.lane.b32.xlu0 %v758, 64
    %v762 = vpop.permute.xlu0 %761
    %v764 = vmul.f32 %v757, %v762
    %766 = vrot.lane.b32.xlu0 %v764, 32
    %v767 = vpop.permute.xlu0 %766
    %v769 = vadd.f32 %v759, %v767
    %v770 = vtanh.pop %v769
    %772 = vrot.lane.b32.xlu0 %v770, 64
    %v773 = vpop.permute.xlu0 %772
    %v775 = vmul.f32 %v757, %v773
    %777 = vrot.lane.b32.xlu0 %v775, 32
    %v778 = vpop.permute.xlu0 %777
    %v779 = vsel %vm442, %v778, 0
    %781 = vmatpush.msra.mxu0 0.0
    %782 = vmatpush.msra.mxu0 0.0
    %783 = vmatpush.msra.mxu0 0.0
    %784 = vmatpush.msra.mxu0 0.0
    %785 = vmatpush.msra.mxu0 0.0
    %786 = vmatpush.msra.mxu0 0.0
    %787 = vmatpush.msra.mxu0 0.0
    %788 = vmatpush.msra.mxu0 0.0
    %789 = vmatpush.msra.mxu0 0.0
    %790 = vmatpush.msra.mxu0 0.0
    %791 = vmatpush.msra.mxu0 0.0
    %792 = vmatpush.msra.mxu0 0.0
    %793 = vmatpush.msra.mxu0 %v513
    %794 = vmatpush.msra.mxu0 %v511
    %795 = vmatpush.msra.mxu0 %v509
    %796 = vmatpush.msra.mxu0 %v507
    %797 = vmatmul.f32.gmra.mxu0 %v779
    %v798 = vpop.f32.mrf.mxu0
    %v799 = vadd.f32 0.0, %v798
    %800 = vdwg.mxu0
    %v801 = vadd.f32 %v799, %v561
    %v802 = vmax.f32 %v563, %v649
    %v803 = vmax.f32 %v802, %v735
    %v804 = vmax.f32 %v803, %v801
    %v805 = vsub.f32 %v563, %v804
    %v806 = vmul.f32 %v805, 1.442695
    %v807 = vpow.pop %v806
    %v808 = vsub.f32 %v649, %v804
    %v809 = vmul.f32 %v808, 1.442695
    %v810 = vpow.pop %v809
    %v811 = vsub.f32 %v735, %v804
    %v812 = vmul.f32 %v811, 1.442695
    %v813 = vpow.pop %v812
    %v814 = vsub.f32 %v801, %v804
    %v815 = vmul.f32 %v814, 1.442695
    %v816 = vpow.pop %v815
    %v817 = vadd.f32 %v807, %v810
    %v818 = vadd.f32 %v817, %v813
    %v819 = vadd.f32 %v818, %v816
    %v820 = vrcp.pop %v819
    %v821 = vmul.f32 %v819, %v820
    %v822 = vsub.f32 1.0, %v821
    %v823 = vmul.f32 %v820, %v822
    %v824 = vadd.f32 %v820, %v823
    %vm825 = vweird.f32 %v819
    %vm826 = vweird.f32 %v820
    %vm827 = vmor %vm825, %vm826
    %v828 = vsel %vm827, %v820, %v824
    %v829 = vand.u32 2147483647, %v819
    %vm830 = vcmp.eq.f32.partialorder %v829, 8.507059e+37
    %v831 = vand.u32 %v819, 2147483648
    %v832 = vor.u32 1.1754944e-38, %v831
    %v833 = vsel %vm830, %v832, %v828
    %v834 = vmul.f32 1.0, %v833
    %v835 = vmul.f32 %v807, %v834
    %vm836 = vcmask 254976
    %837 = vst.msk [vmem:[#allocation14] sm:$0x3] %vm836, %v835
    %v839 = vmul.f32 %v835, %v516
    %v840 = vadd.f32 %v839, 0.0
    %v841 = vmul.f32 %v810, %v834
    %s842 = scalar_lea.vmem [#allocation14], 2
    %843 = vst.msk [vmem:[%s842] sm:$0x3] %vm836, %v841
    %v845 = vmul.f32 %v841, %v606
    %v846 = vadd.f32 %v840, %v845
    %v847 = vmul.f32 %v813, %v834
    %s848 = scalar_lea.vmem [#allocation14], 4
    %849 = vst.msk [vmem:[%s848] sm:$0x3] %vm836, %v847
    %v851 = vmul.f32 %v847, %v692
    %v852 = vadd.f32 %v846, %v851
    %v853 = vmul.f32 %v816, %v834
    %s854 = scalar_lea.vmem [#allocation14], 6
    %855 = vst.msk [vmem:[%s854] sm:$0x3] %vm836, %v853
    %v857 = vmul.f32 %v853, %v778
    %v858 = vadd.f32 %v852, %v857
    %v859 = vld [vmem:[%s11] sm:$0xff]
    %v860 = vld [vmem:[%s11 + $0x8] sm:$0xff]
    %v861 = vld [vmem:[%s11 + $0x10] sm:$0xff]
    %v862 = vld [vmem:[%s11 + $0x18] sm:$0xff]
    %v863 = vld [vmem:[%s12] sm:$0x1]
    %v865 = vperm.slane %v863, 0
    %v868 = vsel %vm442, %v858, 0
    %870 = vmatpush.msra.mxu0 0.0
    %871 = vmatpush.msra.mxu0 0.0
    %872 = vmatpush.msra.mxu0 0.0
    %873 = vmatpush.msra.mxu0 0.0
    %874 = vmatpush.msra.mxu0 0.0
    %875 = vmatpush.msra.mxu0 0.0
    %876 = vmatpush.msra.mxu0 0.0
    %877 = vmatpush.msra.mxu0 0.0
    %878 = vmatpush.msra.mxu0 0.0
    %879 = vmatpush.msra.mxu0 0.0
    %880 = vmatpush.msra.mxu0 0.0
    %881 = vmatpush.msra.mxu0 0.0
    %882 = vmatpush.msra.mxu0 %v862
    %883 = vmatpush.msra.mxu0 %v861
    %884 = vmatpush.msra.mxu0 %v860
    %885 = vmatpush.msra.mxu0 %v859
    %886 = vmatmul.f32.gmra.mxu0 %v868
    %v887 = vpop.f32.mrf.mxu0
    %v888 = vadd.f32 %v865, %v887
    %889 = vdwg.mxu0
    %vm890 = vcmask 58368
    %891 = vst.msk [vmem:[#allocation13] sm:$0x3] %vm890, %v888
    // Predicated region
    $region66: #{tpu_custom_call.1} parent=1 // pred_check
      _
    $region67: #{tpu_custom_call.1} parent=1 // pred_check_branch
      %893 = sbr.rel (0) target = $region69
    $region68: #{tpu_custom_call.1} parent=1 // pred_region
      %895 = vsyncadd [#allocation9], 0
      %s897 = sshll.u32 [#allocation13], 4
      %s898 = int_to_ptr.vmem [resolvable:$true] %s897
      %s899 = sshll.u32 %s13, 4
      %s900 = int_to_ptr.hbm [resolvable:$true] %s899
      %902 = dma.vmem_to_hbm [thread:$0]  %s898, 32, %s900, [#allocation9]
    $region69: #{tpu_custom_call.1} parent=1 // pred_fallthru
      _
    // Predicated region
    $region70: #{tpu_custom_call.1} parent=1 // pred_check
      _
    $region71: #{tpu_custom_call.1} parent=1 // pred_check_branch
      %904 = sbr.rel (0) target = $region73
    $region72: #{tpu_custom_call.1} parent=1 // pred_region
      %906 = vsyncadd [#allocation15], 0
      %s907 = sshll.u32 [#allocation14], 4
      %s908 = int_to_ptr.vmem [resolvable:$true] %s907
      %s909 = sshll.u32 %s14, 4
      %s910 = int_to_ptr.hbm [resolvable:$true] %s909
      %915 = dma.vmem_to_hbm [thread:$0]  %s908, 128, %s910, [#allocation15], 32, 32, 2
    $region73: #{tpu_custom_call.1} parent=1 // pred_fallthru
      _
    // Predicated region
    $region74: #{tpu_custom_call.1} parent=1 // pred_check
      _
    $region75: #{tpu_custom_call.1} parent=1 // pred_check_branch
      %917 = sbr.rel (0) target = $region77
    $region76: #{tpu_custom_call.1} parent=1 // pred_region
      %919 = dma.done [#allocation9], 32
    $region77: #{tpu_custom_call.1} parent=1 // pred_fallthru
      _
    // Predicated region
    $region78: #{tpu_custom_call.1} parent=1 // pred_check
      _
    $region79: #{tpu_custom_call.1} parent=1 // pred_check_branch
      %921 = sbr.rel (0) target = $region81
    $region80: #{tpu_custom_call.1} parent=1 // pred_region
      %923 = dma.done [#allocation15], 128
    $region81: #{tpu_custom_call.1} parent=1 // pred_fallthru
      _
    %924 = vsyncpa [#allocation8], 1
    %925 = vsyncpa [#allocation11], 1
    %926 = vsyncpa [#allocation9], 1
    %927 = vsyncpa [#allocation15], 1

</llo_original>
